<compile_context>
chip_gen: v7x
topology: tpu7x:2x2x1
jax: 0.10.0
libtpu: 0.0.40
codegen_flags: <defaults>
</compile_context>

<pallas_src>
import math
import functools

import jax
import jax.numpy as jnp
from jax.experimental import pallas as pl
from jax.experimental.pallas import tpu as pltpu

# ---------------- synthetic config (stands in for the HF AutoConfig) ----------------
VOCAB = 100
MAX_POS = 64
D_MODEL = 32
N_HEADS = 2
HEAD_DIM = D_MODEL // N_HEADS
N_LAYERS = 2
FFN_DIM = 64
OUTPUT_DIM = 16
PROJ_HIDDEN = (D_MODEL + OUTPUT_DIM) // 2   # hidden_size of the 'mlp' proj
PAD_ID = 0
LN_EPS = 1e-12


# ---------------- in-kernel helpers ----------------
def _gelu(x):
    # TODO(synk): PyTorch nn.GELU() is exact erf GELU; using Mosaic-safe tanh approximation.
    return jax.nn.gelu(x, approximate=True)


def _layernorm(x, gamma, beta):
    mu = jnp.mean(x, axis=-1, keepdims=True)
    var = jnp.mean((x - mu) ** 2, axis=-1, keepdims=True)
    return (x - mu) * jax.lax.rsqrt(var + LN_EPS) * gamma + beta


# ---------------- fused forward kernel ----------------
def _fused_encoder_kernel(B, S,
                          h_ref, mask_ref,
                          embg_ref, embb_ref,
                          wqkv_ref, bqkv_ref, wo_ref, bo_ref,
                          ln1g_ref, ln1b_ref, w1_ref, b1_ref,
                          w2_ref, b2_ref, ln2g_ref, ln2b_ref,
                          pw1_ref, pw2_ref,
                          o_ref, acc_ref):
    BS = B * S
    D = D_MODEL

    # embedding LayerNorm (token+pos embedding gather done in the wrapper); h stays VMEM-resident.
    acc_ref[...] = _layernorm(h_ref[...], embg_ref[...], embb_ref[...])

    m = mask_ref[...]                                  # (B, S) float {0., 1.}
    # additive attention bias over keys: 0 (valid) / -1e9 (pad); hoisted out of the layer loop.
    bias = ((m - 1.0) * 1e9)[:, None, :]               # (B, 1, S)
    scale = 1.0 / math.sqrt(HEAD_DIM)

    def layer_body(l, carry):
        h = acc_ref[...]                               # (B*S, D)

        # fused QKV: one (B*S, D) x (D, 3D) matmul + one bias add
        qkv = jnp.dot(h, wqkv_ref[l], preferred_element_type=jnp.float32) + bqkv_ref[l]
        q = qkv[:, 0 * D:1 * D]
        k = qkv[:, 1 * D:2 * D]
        v = qkv[:, 2 * D:3 * D]

        wo = wo_ref[l]                                 # (D, D)
        attn_out = jnp.zeros((BS, D), jnp.float32)
        # Heads: short static loop (N_HEADS=2). The per-head output projection is folded into a
        # row-slice of W_O and summed, so no jnp.concatenate / lane re-layout is needed to merge
        # heads; attention itself is batched over the batch dim via 3D einsum.
        for hd in range(N_HEADS):
            sl = slice(hd * HEAD_DIM, (hd + 1) * HEAD_DIM)
            qh = q[:, sl].reshape(B, S, HEAD_DIM)
            kh = k[:, sl].reshape(B, S, HEAD_DIM)
            vh = v[:, sl].reshape(B, S, HEAD_DIM)
            s = jnp.einsum('bqd,bkd->bqk', qh, kh,
                           preferred_element_type=jnp.float32) * scale + bias
            s = s - jnp.max(s, axis=-1, keepdims=True)
            p = jnp.exp(s)
            p = p * pl.reciprocal(jnp.sum(p, axis=-1, keepdims=True), approx=True)
            ctx = jnp.einsum('bqk,bkd->bqd', p, vh,
                             preferred_element_type=jnp.float32)
            attn_out = attn_out + jnp.dot(ctx.reshape(BS, HEAD_DIM), wo[sl, :],
                                          preferred_element_type=jnp.float32)
        attn_out = attn_out + bo_ref[l]

        x1 = _layernorm(h + attn_out, ln1g_ref[l], ln1b_ref[l])
        ff = _gelu(jnp.dot(x1, w1_ref[l], preferred_element_type=jnp.float32) + b1_ref[l])
        ff = jnp.dot(ff, w2_ref[l], preferred_element_type=jnp.float32) + b2_ref[l]
        acc_ref[...] = _layernorm(x1 + ff, ln2g_ref[l], ln2b_ref[l])
        return carry

    jax.lax.fori_loop(0, N_LAYERS, layer_body, 0)

    # mean_pooler + MLP projection (still inside the same kernel)
    hf = acc_ref[...].reshape(B, S, D)
    pooled = jnp.sum(hf * m[:, :, None], axis=1)                       # (B, D)
    denom = jnp.maximum(jnp.sum(m, axis=1, keepdims=True), 1.0)        # clamp all-pad rows
    pooled = pooled * pl.reciprocal(denom, approx=True)
    mid = _gelu(jnp.dot(pooled, pw1_ref[...], preferred_element_type=jnp.float32))
    o_ref[...] = jnp.dot(mid, pw2_ref[...],
                         preferred_element_type=jnp.float32).astype(o_ref.dtype)


# ---------------- parameters (deterministic synthetic init, per-layer weights stacked) --------------
def init_params(key):
    def nrm(k, shape, scale=0.02):
        return scale * jax.random.normal(k, shape, dtype=jnp.float32)

    keys = jax.random.split(key, 4 + N_LAYERS)
    params = {
        "word_emb": nrm(keys[0], (VOCAB, D_MODEL)),
        "pos_emb": nrm(keys[1], (MAX_POS, D_MODEL)),
        "emb_ln_g": jnp.ones((1, D_MODEL), jnp.float32),
        "emb_ln_b": jnp.zeros((1, D_MODEL), jnp.float32),
        # proj = Sequential(Linear(d_model, hidden, bias=False), GELU(), Linear(hidden, out, bias=False))
        "proj_w1": nrm(keys[2], (D_MODEL, PROJ_HIDDEN)),
        "proj_w2": nrm(keys[3], (PROJ_HIDDEN, OUTPUT_DIM)),
    }
    lists = {k: [] for k in ["wqkv", "bqkv", "wo", "bo", "ln1_g", "ln1_b",
                             "w1", "b1", "w2", "b2", "ln2_g", "ln2_b"]}
    for li in range(N_LAYERS):
        lk = jax.random.split(keys[4 + li], 6)
        # q|k|v weights fused column-wise into a single (D, 3D) operand
        lists["wqkv"].append(jnp.concatenate([nrm(lk[0], (D_MODEL, D_MODEL)),
                                              nrm(lk[1], (D_MODEL, D_MODEL)),
                                              nrm(lk[2], (D_MODEL, D_MODEL))], axis=1))
        lists["bqkv"].append(jnp.zeros((1, 3 * D_MODEL), jnp.float32))
        lists["wo"].append(nrm(lk[3], (D_MODEL, D_MODEL)))
        lists["bo"].append(jnp.zeros((1, D_MODEL), jnp.float32))
        lists["ln1_g"].append(jnp.ones((1, D_MODEL), jnp.float32))
        lists["ln1_b"].append(jnp.zeros((1, D_MODEL), jnp.float32))
        lists["w1"].append(nrm(lk[4], (D_MODEL, FFN_DIM)))
        lists["b1"].append(jnp.zeros((1, FFN_DIM), jnp.float32))
        lists["w2"].append(nrm(lk[5], (FFN_DIM, D_MODEL)))
        lists["b2"].append(jnp.zeros((1, D_MODEL), jnp.float32))
        lists["ln2_g"].append(jnp.ones((1, D_MODEL), jnp.float32))
        lists["ln2_b"].append(jnp.zeros((1, D_MODEL), jnp.float32))
    params.update({k: jnp.stack(v) for k, v in lists.items()})   # (N_LAYERS, ...)
    return params


# ---------------- full forward (HFTextEncoder.forward) ----------------
@jax.jit
def hf_text_encoder_forward(params, input_ids):
    B, S = input_ids.shape
    # attn_mask = (x != self.config.pad_token_id)
    maskf = (input_ids != PAD_ID).astype(jnp.float32)          # (B, S)

    # embeddings: gather + positional add is glue (plain JAX); everything else is one Pallas kernel.
    pos = jnp.arange(S)
    h = params["word_emb"][input_ids] + params["pos_emb"][pos][None, :, :]
    h = h.reshape(B * S, D_MODEL)                              # (B*S) flattened into the matmul M dim

    kernel = functools.partial(_fused_encoder_kernel, B, S)
    vmem = pltpu.MemorySpace.VMEM
    n_inputs = 18
    return pl.pallas_call(
        kernel,
        out_shape=jax.ShapeDtypeStruct((B, OUTPUT_DIM), jnp.float32),
        in_specs=[pl.BlockSpec(memory_space=vmem)] * n_inputs,
        out_specs=pl.BlockSpec(memory_space=vmem),
        scratch_shapes=[pltpu.VMEM((B * S, D_MODEL), jnp.float32)],   # VMEM-resident hidden state
    )(h, maskf,
      params["emb_ln_g"], params["emb_ln_b"],
      params["wqkv"], params["bqkv"], params["wo"], params["bo"],
      params["ln1_g"], params["ln1_b"], params["w1"], params["b1"],
      params["w2"], params["b2"], params["ln2_g"], params["ln2_b"],
      params["proj_w1"], params["proj_w2"])


if __name__ == "__main__":
    root = jax.random.PRNGKey(0)
    pkey, ikey = jax.random.split(root)
    params = init_params(pkey)

    B, S = 2, 8
    ids = jax.random.randint(ikey, (B, S), 1, VOCAB, dtype=jnp.int32)
    # introduce some padding so the mask / mean_pooler path is exercised
    ids = ids.at[0, 6:].set(PAD_ID)
    ids = ids.at[1, 4:].set(PAD_ID)

    out = hf_text_encoder_forward(params, ids)
    out = jax.block_until_ready(out)
    assert out.shape == (B, OUTPUT_DIM) and out.dtype == jnp.float32
    assert bool(jnp.all(jnp.isfinite(out)))
    print("KERNEL_OK")
</pallas_src>

<mosaic_0001>
module attributes {stable_mosaic.version = 11 : i64} {
  func.func @_fused_encoder_kernel(%arg0: memref<16x32xf32, #tpu.memory_space<vmem>>, %arg1: memref<2x8xf32, #tpu.memory_space<vmem>>, %arg2: memref<1x32xf32, #tpu.memory_space<vmem>>, %arg3: memref<1x32xf32, #tpu.memory_space<vmem>>, %arg4: memref<2x32x96xf32, #tpu.memory_space<vmem>>, %arg5: memref<2x1x96xf32, #tpu.memory_space<vmem>>, %arg6: memref<2x32x32xf32, #tpu.memory_space<vmem>>, %arg7: memref<2x1x32xf32, #tpu.memory_space<vmem>>, %arg8: memref<2x1x32xf32, #tpu.memory_space<vmem>>, %arg9: memref<2x1x32xf32, #tpu.memory_space<vmem>>, %arg10: memref<2x32x64xf32, #tpu.memory_space<vmem>>, %arg11: memref<2x1x64xf32, #tpu.memory_space<vmem>>, %arg12: memref<2x64x32xf32, #tpu.memory_space<vmem>>, %arg13: memref<2x1x32xf32, #tpu.memory_space<vmem>>, %arg14: memref<2x1x32xf32, #tpu.memory_space<vmem>>, %arg15: memref<2x1x32xf32, #tpu.memory_space<vmem>>, %arg16: memref<32x24xf32, #tpu.memory_space<vmem>>, %arg17: memref<24x16xf32, #tpu.memory_space<vmem>>, %arg18: memref<2x16xf32, #tpu.memory_space<vmem>>, %arg19: memref<16x32xf32, #tpu.memory_space<vmem>>) attributes {dimension_semantics = [], scalar_prefetch = 0 : i64, scratch_operands = 1 : i64, tpu.core_type = #tpu.core_type<tc>} {
    %c0 = arith.constant 0 : index
    %c0_0 = arith.constant 0 : index
    %0 = vector.load %arg0[%c0, %c0_0] : memref<16x32xf32, #tpu.memory_space<vmem>>, vector<16x32xf32>
    %c0_1 = arith.constant 0 : index
    %c0_2 = arith.constant 0 : index
    %1 = vector.load %arg2[%c0_1, %c0_2] : memref<1x32xf32, #tpu.memory_space<vmem>>, vector<1x32xf32>
    %c0_3 = arith.constant 0 : index
    %c0_4 = arith.constant 0 : index
    %2 = vector.load %arg3[%c0_3, %c0_4] : memref<1x32xf32, #tpu.memory_space<vmem>>, vector<1x32xf32>
    %cst = arith.constant dense<0.000000e+00> : vector<16xf32>
    %3 = vector.multi_reduction <add>, %0, %cst [1] : vector<16x32xf32> to vector<16xf32>
    %4 = vector.shape_cast %3 : vector<16xf32> to vector<16x1xf32>
    %cst_5 = arith.constant 3.200000e+01 : f32
    %5 = vector.broadcast %cst_5 : f32 to vector<16x1xf32>
    %6 = arith.divf %4, %5 : vector<16x1xf32>
    %7 = vector.broadcast %6 : vector<16x1xf32> to vector<16x32xf32>
    %8 = arith.subf %0, %7 : vector<16x32xf32>
    %9 = arith.mulf %8, %8 : vector<16x32xf32>
    %cst_6 = arith.constant dense<0.000000e+00> : vector<16xf32>
    %10 = vector.multi_reduction <add>, %9, %cst_6 [1] : vector<16x32xf32> to vector<16xf32>
    %11 = vector.shape_cast %10 : vector<16xf32> to vector<16x1xf32>
    %cst_7 = arith.constant 3.200000e+01 : f32
    %12 = vector.broadcast %cst_7 : f32 to vector<16x1xf32>
    %13 = arith.divf %11, %12 : vector<16x1xf32>
    %14 = vector.broadcast %6 : vector<16x1xf32> to vector<16x32xf32>
    %15 = arith.subf %0, %14 : vector<16x32xf32>
    %cst_8 = arith.constant 9.99999996E-13 : f32
    %16 = vector.broadcast %cst_8 : f32 to vector<16x1xf32>
    %17 = arith.addf %13, %16 : vector<16x1xf32>
    %18 = math.rsqrt %17 : vector<16x1xf32>
    %19 = vector.broadcast %18 : vector<16x1xf32> to vector<16x32xf32>
    %20 = arith.mulf %15, %19 : vector<16x32xf32>
    %21 = vector.broadcast %1 : vector<1x32xf32> to vector<16x32xf32>
    %22 = arith.mulf %20, %21 : vector<16x32xf32>
    %23 = vector.broadcast %2 : vector<1x32xf32> to vector<16x32xf32>
    %24 = arith.addf %22, %23 : vector<16x32xf32>
    %c0_9 = arith.constant 0 : index
    %c0_10 = arith.constant 0 : index
    %25 = vector.load %arg19[%c0_9, %c0_10] : memref<16x32xf32, #tpu.memory_space<vmem>>, vector<16x32xf32>
    tpu.vector_store %arg19[%c0_9, %c0_10], %24 {strides = array<i32>} : memref<16x32xf32, #tpu.memory_space<vmem>>, vector<16x32xf32>,
    %c0_11 = arith.constant 0 : index
    %c0_12 = arith.constant 0 : index
    %26 = vector.load %arg1[%c0_11, %c0_12] : memref<2x8xf32, #tpu.memory_space<vmem>>, vector<2x8xf32>
    %cst_13 = arith.constant 1.000000e+00 : f32
    %27 = vector.broadcast %cst_13 : f32 to vector<2x8xf32>
    %28 = arith.subf %26, %27 : vector<2x8xf32>
    %cst_14 = arith.constant 1.000000e+09 : f32
    %29 = vector.broadcast %cst_14 : f32 to vector<2x8xf32>
    %30 = arith.mulf %28, %29 : vector<2x8xf32>
    %31 = vector.shape_cast %30 : vector<2x8xf32> to vector<2x1x8xf32>
    %c0_i32 = arith.constant 0 : i32
    %c2_i32 = arith.constant 2 : i32
    %32 = arith.addi %c0_i32, %c2_i32 : i32
    %c1_i32 = arith.constant 1 : i32
    scf.for %arg20 = %c0_i32 to %32 step %c1_i32  : i32 {
      %c0_33 = arith.constant 0 : index
      %c0_34 = arith.constant 0 : index
      %64 = vector.load %arg19[%c0_33, %c0_34] : memref<16x32xf32, #tpu.memory_space<vmem>>, vector<16x32xf32>
      %65 = arith.index_cast %arg20 : i32 to index
      %c0_35 = arith.constant 0 : index
      %c0_36 = arith.constant 0 : index
      %66 = vector.load %arg4[%65, %c0_35, %c0_36] : memref<2x32x96xf32, #tpu.memory_space<vmem>>, vector<1x32x96xf32>
      %67 = vector.shape_cast %66 : vector<1x32x96xf32> to vector<32x96xf32>
      %cst_37 = arith.constant dense<0.000000e+00> : vector<16x96xf32>
      %68 = tpu.matmul %64, %67, %cst_37 {dimension_numbers = #tpu.dot_dimension_numbers<[1], [0], [0], [1], [0, 0, 1, 1], [], []>} : vector<16x32xf32>, vector<32x96xf32>, vector<16x96xf32> -> vector<16x96xf32>
      %69 = arith.index_cast %arg20 : i32 to index
      %c0_38 = arith.constant 0 : index
      %c0_39 = arith.constant 0 : index
      %70 = vector.load %arg5[%69, %c0_38, %c0_39] : memref<2x1x96xf32, #tpu.memory_space<vmem>>, vector<1x1x96xf32>
      %71 = vector.shape_cast %70 : vector<1x1x96xf32> to vector<1x96xf32>
      %72 = vector.broadcast %71 : vector<1x96xf32> to vector<16x96xf32>
      %73 = arith.addf %68, %72 : vector<16x96xf32>
      %74 = vector.extract_strided_slice %73 {offsets = [0, 0], sizes = [16, 32], strides = [1, 1]} : vector<16x96xf32> to vector<16x32xf32>
      %75 = vector.extract_strided_slice %73 {offsets = [0, 32], sizes = [16, 32], strides = [1, 1]} : vector<16x96xf32> to vector<16x32xf32>
      %76 = vector.extract_strided_slice %73 {offsets = [0, 64], sizes = [16, 32], strides = [1, 1]} : vector<16x96xf32> to vector<16x32xf32>
      %77 = arith.index_cast %arg20 : i32 to index
      %c0_40 = arith.constant 0 : index
      %c0_41 = arith.constant 0 : index
      %78 = vector.load %arg6[%77, %c0_40, %c0_41] : memref<2x32x32xf32, #tpu.memory_space<vmem>>, vector<1x32x32xf32>
      %79 = vector.shape_cast %78 : vector<1x32x32xf32> to vector<32x32xf32>
      %cst_42 = arith.constant 0.000000e+00 : f32
      %80 = vector.broadcast %cst_42 : f32 to vector<16x32xf32>
      %81 = vector.extract_strided_slice %74 {offsets = [0, 0], sizes = [16, 16], strides = [1, 1]} : vector<16x32xf32> to vector<16x16xf32>
      %82 = vector.shape_cast %81 : vector<16x16xf32> to vector<2x8x16xf32>
      %83 = vector.extract_strided_slice %75 {offsets = [0, 0], sizes = [16, 16], strides = [1, 1]} : vector<16x32xf32> to vector<16x16xf32>
      %84 = vector.shape_cast %83 : vector<16x16xf32> to vector<2x8x16xf32>
      %85 = vector.extract_strided_slice %76 {offsets = [0, 0], sizes = [16, 16], strides = [1, 1]} : vector<16x32xf32> to vector<16x16xf32>
      %86 = vector.shape_cast %85 : vector<16x16xf32> to vector<2x8x16xf32>
      "tpu.trace_start"() <{level = 10 : i32, message = "bqd,bkd->bqk"}> : () -> ()
      %cst_43 = arith.constant dense<0.000000e+00> : vector<2x8x8xf32>
      %87 = tpu.matmul %82, %84, %cst_43 {dimension_numbers = #tpu.dot_dimension_numbers<[2], [2], [1], [1], [0, 0, 0, 1, 1, 1], [0], [0]>} : vector<2x8x16xf32>, vector<2x8x16xf32>, vector<2x8x8xf32> -> vector<2x8x8xf32>
      "tpu.trace_stop"() : () -> ()
      %cst_44 = arith.constant 2.500000e-01 : f32
      %88 = vector.broadcast %cst_44 : f32 to vector<2x8x8xf32>
      %89 = arith.mulf %87, %88 : vector<2x8x8xf32>
      %90 = vector.broadcast %31 : vector<2x1x8xf32> to vector<2x8x8xf32>
      %91 = arith.addf %89, %90 : vector<2x8x8xf32>
      %cst_45 = arith.constant dense<0xFF800000> : vector<2x8xf32>
      %92 = vector.multi_reduction <maximumf>, %91, %cst_45 [2] : vector<2x8x8xf32> to vector<2x8xf32>
      %93 = vector.shape_cast %92 : vector<2x8xf32> to vector<2x8x1xf32>
      %94 = vector.broadcast %93 : vector<2x8x1xf32> to vector<2x8x8xf32>
      %95 = arith.subf %91, %94 : vector<2x8x8xf32>
      %96 = math.exp %95 : vector<2x8x8xf32>
      %cst_46 = arith.constant dense<0.000000e+00> : vector<2x8xf32>
      %97 = vector.multi_reduction <add>, %96, %cst_46 [2] : vector<2x8x8xf32> to vector<2x8xf32>
      %98 = vector.shape_cast %97 : vector<2x8xf32> to vector<2x8x1xf32>
      %99 = tpu.reciprocal %98 {approx = true} : vector<2x8x1xf32> -> vector<2x8x1xf32>
      %100 = vector.broadcast %99 : vector<2x8x1xf32> to vector<2x8x8xf32>
      %101 = arith.mulf %96, %100 : vector<2x8x8xf32>
      "tpu.trace_start"() <{level = 10 : i32, message = "bqk,bkd->bqd"}> : () -> ()
      %cst_47 = arith.constant dense<0.000000e+00> : vector<2x8x16xf32>
      %102 = tpu.matmul %101, %86, %cst_47 {dimension_numbers = #tpu.dot_dimension_numbers<[2], [1], [1], [2], [0, 0, 0, 1, 1, 2], [0], [0]>} : vector<2x8x8xf32>, vector<2x8x16xf32>, vector<2x8x16xf32> -> vector<2x8x16xf32>
      "tpu.trace_stop"() : () -> ()
      %103 = vector.shape_cast %102 : vector<2x8x16xf32> to vector<16x16xf32>
      %104 = vector.extract_strided_slice %79 {offsets = [0, 0], sizes = [16, 32], strides = [1, 1]} : vector<32x32xf32> to vector<16x32xf32>
      %cst_48 = arith.constant dense<0.000000e+00> : vector<16x32xf32>
      %105 = tpu.matmul %103, %104, %cst_48 {dimension_numbers = #tpu.dot_dimension_numbers<[1], [0], [0], [1], [0, 0, 1, 1], [], []>} : vector<16x16xf32>, vector<16x32xf32>, vector<16x32xf32> -> vector<16x32xf32>
      %106 = arith.addf %80, %105 : vector<16x32xf32>
      %107 = vector.extract_strided_slice %74 {offsets = [0, 16], sizes = [16, 16], strides = [1, 1]} : vector<16x32xf32> to vector<16x16xf32>
      %108 = vector.shape_cast %107 : vector<16x16xf32> to vector<2x8x16xf32>
      %109 = vector.extract_strided_slice %75 {offsets = [0, 16], sizes = [16, 16], strides = [1, 1]} : vector<16x32xf32> to vector<16x16xf32>
      %110 = vector.shape_cast %109 : vector<16x16xf32> to vector<2x8x16xf32>
      %111 = vector.extract_strided_slice %76 {offsets = [0, 16], sizes = [16, 16], strides = [1, 1]} : vector<16x32xf32> to vector<16x16xf32>
      %112 = vector.shape_cast %111 : vector<16x16xf32> to vector<2x8x16xf32>
      "tpu.trace_start"() <{level = 10 : i32, message = "bqd,bkd->bqk"}> : () -> ()
      %cst_49 = arith.constant dense<0.000000e+00> : vector<2x8x8xf32>
      %113 = tpu.matmul %108, %110, %cst_49 {dimension_numbers = #tpu.dot_dimension_numbers<[2], [2], [1], [1], [0, 0, 0, 1, 1, 1], [0], [0]>} : vector<2x8x16xf32>, vector<2x8x16xf32>, vector<2x8x8xf32> -> vector<2x8x8xf32>
      "tpu.trace_stop"() : () -> ()
      %cst_50 = arith.constant 2.500000e-01 : f32
      %114 = vector.broadcast %cst_50 : f32 to vector<2x8x8xf32>
      %115 = arith.mulf %113, %114 : vector<2x8x8xf32>
      %116 = vector.broadcast %31 : vector<2x1x8xf32> to vector<2x8x8xf32>
      %117 = arith.addf %115, %116 : vector<2x8x8xf32>
      %cst_51 = arith.constant dense<0xFF800000> : vector<2x8xf32>
      %118 = vector.multi_reduction <maximumf>, %117, %cst_51 [2] : vector<2x8x8xf32> to vector<2x8xf32>
      %119 = vector.shape_cast %118 : vector<2x8xf32> to vector<2x8x1xf32>
      %120 = vector.broadcast %119 : vector<2x8x1xf32> to vector<2x8x8xf32>
      %121 = arith.subf %117, %120 : vector<2x8x8xf32>
      %122 = math.exp %121 : vector<2x8x8xf32>
      %cst_52 = arith.constant dense<0.000000e+00> : vector<2x8xf32>
      %123 = vector.multi_reduction <add>, %122, %cst_52 [2] : vector<2x8x8xf32> to vector<2x8xf32>
      %124 = vector.shape_cast %123 : vector<2x8xf32> to vector<2x8x1xf32>
      %125 = tpu.reciprocal %124 {approx = true} : vector<2x8x1xf32> -> vector<2x8x1xf32>
      %126 = vector.broadcast %125 : vector<2x8x1xf32> to vector<2x8x8xf32>
      %127 = arith.mulf %122, %126 : vector<2x8x8xf32>
      "tpu.trace_start"() <{level = 10 : i32, message = "bqk,bkd->bqd"}> : () -> ()
      %cst_53 = arith.constant dense<0.000000e+00> : vector<2x8x16xf32>
      %128 = tpu.matmul %127, %112, %cst_53 {dimension_numbers = #tpu.dot_dimension_numbers<[2], [1], [1], [2], [0, 0, 0, 1, 1, 2], [0], [0]>} : vector<2x8x8xf32>, vector<2x8x16xf32>, vector<2x8x16xf32> -> vector<2x8x16xf32>
      "tpu.trace_stop"() : () -> ()
      %129 = vector.shape_cast %128 : vector<2x8x16xf32> to vector<16x16xf32>
      %130 = vector.extract_strided_slice %79 {offsets = [16, 0], sizes = [16, 32], strides = [1, 1]} : vector<32x32xf32> to vector<16x32xf32>
      %cst_54 = arith.constant dense<0.000000e+00> : vector<16x32xf32>
      %131 = tpu.matmul %129, %130, %cst_54 {dimension_numbers = #tpu.dot_dimension_numbers<[1], [0], [0], [1], [0, 0, 1, 1], [], []>} : vector<16x16xf32>, vector<16x32xf32>, vector<16x32xf32> -> vector<16x32xf32>
      %132 = arith.addf %106, %131 : vector<16x32xf32>
      %133 = arith.index_cast %arg20 : i32 to index
      %c0_55 = arith.constant 0 : index
      %c0_56 = arith.constant 0 : index
      %134 = vector.load %arg7[%133, %c0_55, %c0_56] : memref<2x1x32xf32, #tpu.memory_space<vmem>>, vector<1x1x32xf32>
      %135 = vector.shape_cast %134 : vector<1x1x32xf32> to vector<1x32xf32>
      %136 = vector.broadcast %135 : vector<1x32xf32> to vector<16x32xf32>
      %137 = arith.addf %132, %136 : vector<16x32xf32>
      %138 = arith.addf %64, %137 : vector<16x32xf32>
      %139 = arith.index_cast %arg20 : i32 to index
      %c0_57 = arith.constant 0 : index
      %c0_58 = arith.constant 0 : index
      %140 = vector.load %arg8[%139, %c0_57, %c0_58] : memref<2x1x32xf32, #tpu.memory_space<vmem>>, vector<1x1x32xf32>
      %141 = vector.shape_cast %140 : vector<1x1x32xf32> to vector<1x32xf32>
      %142 = arith.index_cast %arg20 : i32 to index
      %c0_59 = arith.constant 0 : index
      %c0_60 = arith.constant 0 : index
      %143 = vector.load %arg9[%142, %c0_59, %c0_60] : memref<2x1x32xf32, #tpu.memory_space<vmem>>, vector<1x1x32xf32>
      %144 = vector.shape_cast %143 : vector<1x1x32xf32> to vector<1x32xf32>
      %cst_61 = arith.constant dense<0.000000e+00> : vector<16xf32>
      %145 = vector.multi_reduction <add>, %138, %cst_61 [1] : vector<16x32xf32> to vector<16xf32>
      %146 = vector.shape_cast %145 : vector<16xf32> to vector<16x1xf32>
      %cst_62 = arith.constant 3.200000e+01 : f32
      %147 = vector.broadcast %cst_62 : f32 to vector<16x1xf32>
      %148 = arith.divf %146, %147 : vector<16x1xf32>
      %149 = vector.broadcast %148 : vector<16x1xf32> to vector<16x32xf32>
      %150 = arith.subf %138, %149 : vector<16x32xf32>
      %151 = arith.mulf %150, %150 : vector<16x32xf32>
      %cst_63 = arith.constant dense<0.000000e+00> : vector<16xf32>
      %152 = vector.multi_reduction <add>, %151, %cst_63 [1] : vector<16x32xf32> to vector<16xf32>
      %153 = vector.shape_cast %152 : vector<16xf32> to vector<16x1xf32>
      %cst_64 = arith.constant 3.200000e+01 : f32
      %154 = vector.broadcast %cst_64 : f32 to vector<16x1xf32>
      %155 = arith.divf %153, %154 : vector<16x1xf32>
      %156 = vector.broadcast %148 : vector<16x1xf32> to vector<16x32xf32>
      %157 = arith.subf %138, %156 : vector<16x32xf32>
      %cst_65 = arith.constant 9.99999996E-13 : f32
      %158 = vector.broadcast %cst_65 : f32 to vector<16x1xf32>
      %159 = arith.addf %155, %158 : vector<16x1xf32>
      %160 = math.rsqrt %159 : vector<16x1xf32>
      %161 = vector.broadcast %160 : vector<16x1xf32> to vector<16x32xf32>
      %162 = arith.mulf %157, %161 : vector<16x32xf32>
      %163 = vector.broadcast %141 : vector<1x32xf32> to vector<16x32xf32>
      %164 = arith.mulf %162, %163 : vector<16x32xf32>
      %165 = vector.broadcast %144 : vector<1x32xf32> to vector<16x32xf32>
      %166 = arith.addf %164, %165 : vector<16x32xf32>
      %167 = arith.index_cast %arg20 : i32 to index
      %c0_66 = arith.constant 0 : index
      %c0_67 = arith.constant 0 : index
      %168 = vector.load %arg10[%167, %c0_66, %c0_67] : memref<2x32x64xf32, #tpu.memory_space<vmem>>, vector<1x32x64xf32>
      %169 = vector.shape_cast %168 : vector<1x32x64xf32> to vector<32x64xf32>
      %cst_68 = arith.constant dense<0.000000e+00> : vector<16x64xf32>
      %170 = tpu.matmul %166, %169, %cst_68 {dimension_numbers = #tpu.dot_dimension_numbers<[1], [0], [0], [1], [0, 0, 1, 1], [], []>} : vector<16x32xf32>, vector<32x64xf32>, vector<16x64xf32> -> vector<16x64xf32>
      %171 = arith.index_cast %arg20 : i32 to index
      %c0_69 = arith.constant 0 : index
      %c0_70 = arith.constant 0 : index
      %172 = vector.load %arg11[%171, %c0_69, %c0_70] : memref<2x1x64xf32, #tpu.memory_space<vmem>>, vector<1x1x64xf32>
      %173 = vector.shape_cast %172 : vector<1x1x64xf32> to vector<1x64xf32>
      %174 = vector.broadcast %173 : vector<1x64xf32> to vector<16x64xf32>
      %175 = arith.addf %170, %174 : vector<16x64xf32>
      %176 = arith.mulf %175, %175 : vector<16x64xf32>
      %177 = arith.mulf %175, %176 : vector<16x64xf32>
      %cst_71 = arith.constant 4.471500e-02 : f32
      %178 = vector.broadcast %cst_71 : f32 to vector<16x64xf32>
      %179 = arith.mulf %178, %177 : vector<16x64xf32>
      %180 = arith.addf %175, %179 : vector<16x64xf32>
      %cst_72 = arith.constant 0.797884583 : f32
      %181 = vector.broadcast %cst_72 : f32 to vector<16x64xf32>
      %182 = arith.mulf %181, %180 : vector<16x64xf32>
      %183 = math.tanh %182 : vector<16x64xf32>
      %cst_73 = arith.constant 1.000000e+00 : f32
      %184 = vector.broadcast %cst_73 : f32 to vector<16x64xf32>
      %185 = arith.addf %184, %183 : vector<16x64xf32>
      %cst_74 = arith.constant 5.000000e-01 : f32
      %186 = vector.broadcast %cst_74 : f32 to vector<16x64xf32>
      %187 = arith.mulf %186, %185 : vector<16x64xf32>
      %188 = arith.mulf %175, %187 : vector<16x64xf32>
      %189 = arith.index_cast %arg20 : i32 to index
      %c0_75 = arith.constant 0 : index
      %c0_76 = arith.constant 0 : index
      %190 = vector.load %arg12[%189, %c0_75, %c0_76] : memref<2x64x32xf32, #tpu.memory_space<vmem>>, vector<1x64x32xf32>
      %191 = vector.shape_cast %190 : vector<1x64x32xf32> to vector<64x32xf32>
      %cst_77 = arith.constant dense<0.000000e+00> : vector<16x32xf32>
      %192 = tpu.matmul %188, %191, %cst_77 {dimension_numbers = #tpu.dot_dimension_numbers<[1], [0], [0], [1], [0, 0, 1, 1], [], []>} : vector<16x64xf32>, vector<64x32xf32>, vector<16x32xf32> -> vector<16x32xf32>
      %193 = arith.index_cast %arg20 : i32 to index
      %c0_78 = arith.constant 0 : index
      %c0_79 = arith.constant 0 : index
      %194 = vector.load %arg13[%193, %c0_78, %c0_79] : memref<2x1x32xf32, #tpu.memory_space<vmem>>, vector<1x1x32xf32>
      %195 = vector.shape_cast %194 : vector<1x1x32xf32> to vector<1x32xf32>
      %196 = vector.broadcast %195 : vector<1x32xf32> to vector<16x32xf32>
      %197 = arith.addf %192, %196 : vector<16x32xf32>
      %198 = arith.addf %166, %197 : vector<16x32xf32>
      %199 = arith.index_cast %arg20 : i32 to index
      %c0_80 = arith.constant 0 : index
      %c0_81 = arith.constant 0 : index
      %200 = vector.load %arg14[%199, %c0_80, %c0_81] : memref<2x1x32xf32, #tpu.memory_space<vmem>>, vector<1x1x32xf32>
      %201 = vector.shape_cast %200 : vector<1x1x32xf32> to vector<1x32xf32>
      %202 = arith.index_cast %arg20 : i32 to index
      %c0_82 = arith.constant 0 : index
      %c0_83 = arith.constant 0 : index
      %203 = vector.load %arg15[%202, %c0_82, %c0_83] : memref<2x1x32xf32, #tpu.memory_space<vmem>>, vector<1x1x32xf32>
      %204 = vector.shape_cast %203 : vector<1x1x32xf32> to vector<1x32xf32>
      %cst_84 = arith.constant dense<0.000000e+00> : vector<16xf32>
      %205 = vector.multi_reduction <add>, %198, %cst_84 [1] : vector<16x32xf32> to vector<16xf32>
      %206 = vector.shape_cast %205 : vector<16xf32> to vector<16x1xf32>
      %cst_85 = arith.constant 3.200000e+01 : f32
      %207 = vector.broadcast %cst_85 : f32 to vector<16x1xf32>
      %208 = arith.divf %206, %207 : vector<16x1xf32>
      %209 = vector.broadcast %208 : vector<16x1xf32> to vector<16x32xf32>
      %210 = arith.subf %198, %209 : vector<16x32xf32>
      %211 = arith.mulf %210, %210 : vector<16x32xf32>
      %cst_86 = arith.constant dense<0.000000e+00> : vector<16xf32>
      %212 = vector.multi_reduction <add>, %211, %cst_86 [1] : vector<16x32xf32> to vector<16xf32>
      %213 = vector.shape_cast %212 : vector<16xf32> to vector<16x1xf32>
      %cst_87 = arith.constant 3.200000e+01 : f32
      %214 = vector.broadcast %cst_87 : f32 to vector<16x1xf32>
      %215 = arith.divf %213, %214 : vector<16x1xf32>
      %216 = vector.broadcast %208 : vector<16x1xf32> to vector<16x32xf32>
      %217 = arith.subf %198, %216 : vector<16x32xf32>
      %cst_88 = arith.constant 9.99999996E-13 : f32
      %218 = vector.broadcast %cst_88 : f32 to vector<16x1xf32>
      %219 = arith.addf %215, %218 : vector<16x1xf32>
      %220 = math.rsqrt %219 : vector<16x1xf32>
      %221 = vector.broadcast %220 : vector<16x1xf32> to vector<16x32xf32>
      %222 = arith.mulf %217, %221 : vector<16x32xf32>
      %223 = vector.broadcast %201 : vector<1x32xf32> to vector<16x32xf32>
      %224 = arith.mulf %222, %223 : vector<16x32xf32>
      %225 = vector.broadcast %204 : vector<1x32xf32> to vector<16x32xf32>
      %226 = arith.addf %224, %225 : vector<16x32xf32>
      %c0_89 = arith.constant 0 : index
      %c0_90 = arith.constant 0 : index
      %227 = vector.load %arg19[%c0_89, %c0_90] : memref<16x32xf32, #tpu.memory_space<vmem>>, vector<16x32xf32>
      tpu.vector_store %arg19[%c0_89, %c0_90], %226 {strides = array<i32>} : memref<16x32xf32, #tpu.memory_space<vmem>>, vector<16x32xf32>,
    }
    %c2_i32_15 = arith.constant 2 : i32
    %c0_16 = arith.constant 0 : index
    %c0_17 = arith.constant 0 : index
    %33 = vector.load %arg19[%c0_16, %c0_17] : memref<16x32xf32, #tpu.memory_space<vmem>>, vector<16x32xf32>
    %34 = vector.shape_cast %33 : vector<16x32xf32> to vector<2x8x32xf32>
    %35 = vector.shape_cast %26 : vector<2x8xf32> to vector<2x8x1xf32>
    %36 = vector.broadcast %35 : vector<2x8x1xf32> to vector<2x8x32xf32>
    %37 = arith.mulf %34, %36 : vector<2x8x32xf32>
    %cst_18 = arith.constant dense<0.000000e+00> : vector<2x32xf32>
    %38 = vector.multi_reduction <add>, %37, %cst_18 [1] : vector<2x8x32xf32> to vector<2x32xf32>
    %cst_19 = arith.constant dense<0.000000e+00> : vector<2xf32>
    %39 = vector.multi_reduction <add>, %26, %cst_19 [1] : vector<2x8xf32> to vector<2xf32>
    %40 = vector.shape_cast %39 : vector<2xf32> to vector<2x1xf32>
    %cst_20 = arith.constant 1.000000e+00 : f32
    %41 = vector.broadcast %cst_20 : f32 to vector<2x1xf32>
    %42 = arith.maximumf %40, %41 : vector<2x1xf32>
    %43 = tpu.reciprocal %42 {approx = true} : vector<2x1xf32> -> vector<2x1xf32>
    %44 = vector.broadcast %43 : vector<2x1xf32> to vector<2x32xf32>
    %45 = arith.mulf %38, %44 : vector<2x32xf32>
    %c0_21 = arith.constant 0 : index
    %c0_22 = arith.constant 0 : index
    %46 = vector.load %arg16[%c0_21, %c0_22] : memref<32x24xf32, #tpu.memory_space<vmem>>, vector<32x24xf32>
    %cst_23 = arith.constant dense<0.000000e+00> : vector<2x24xf32>
    %47 = tpu.matmul %45, %46, %cst_23 {dimension_numbers = #tpu.dot_dimension_numbers<[1], [0], [0], [1], [0, 0, 1, 1], [], []>} : vector<2x32xf32>, vector<32x24xf32>, vector<2x24xf32> -> vector<2x24xf32>
    %48 = arith.mulf %47, %47 : vector<2x24xf32>
    %49 = arith.mulf %47, %48 : vector<2x24xf32>
    %cst_24 = arith.constant 4.471500e-02 : f32
    %50 = vector.broadcast %cst_24 : f32 to vector<2x24xf32>
    %51 = arith.mulf %50, %49 : vector<2x24xf32>
    %52 = arith.addf %47, %51 : vector<2x24xf32>
    %cst_25 = arith.constant 0.797884583 : f32
    %53 = vector.broadcast %cst_25 : f32 to vector<2x24xf32>
    %54 = arith.mulf %53, %52 : vector<2x24xf32>
    %55 = math.tanh %54 : vector<2x24xf32>
    %cst_26 = arith.constant 1.000000e+00 : f32
    %56 = vector.broadcast %cst_26 : f32 to vector<2x24xf32>
    %57 = arith.addf %56, %55 : vector<2x24xf32>
    %cst_27 = arith.constant 5.000000e-01 : f32
    %58 = vector.broadcast %cst_27 : f32 to vector<2x24xf32>
    %59 = arith.mulf %58, %57 : vector<2x24xf32>
    %60 = arith.mulf %47, %59 : vector<2x24xf32>
    %c0_28 = arith.constant 0 : index
    %c0_29 = arith.constant 0 : index
    %61 = vector.load %arg17[%c0_28, %c0_29] : memref<24x16xf32, #tpu.memory_space<vmem>>, vector<24x16xf32>
    %cst_30 = arith.constant dense<0.000000e+00> : vector<2x16xf32>
    %62 = tpu.matmul %60, %61, %cst_30 {dimension_numbers = #tpu.dot_dimension_numbers<[1], [0], [0], [1], [0, 0, 1, 1], [], []>} : vector<2x24xf32>, vector<24x16xf32>, vector<2x16xf32> -> vector<2x16xf32>
    %c0_31 = arith.constant 0 : index
    %c0_32 = arith.constant 0 : index
    %63 = vector.load %arg18[%c0_31, %c0_32] : memref<2x16xf32, #tpu.memory_space<vmem>>, vector<2x16xf32>
    tpu.vector_store %arg18[%c0_31, %c0_32], %62 {strides = array<i32>} : memref<2x16xf32, #tpu.memory_space<vmem>>, vector<2x16xf32>,
    return
  }
}

</mosaic_0001>

<llo_original>
// kernel: hf_text_encoder_forward.1
$region0: #{hf_text_encoder_forward.1}
  #allocation0 [shape = 'u32[]', space=smem, size = 0x4, offset = 0x4, fixed_abs, tag = 'smem constant byte address 0x4 - core index']
  #allocation1 [shape = 'u32[144,128]{1,0:T(1,128)}', space=vmem, size = 0x12000, scoped, tag = 'internal scratch']
  #allocation2 [shape = 'f32[16,32]{1,0:T(8,128)}', space=vmem, size = 0x2000, scoped, tag = 'scratch operand']
  %s0 = inlined_call_operand.vmem [shape: f32[16,32], index: 0, kind: input, shape index: {}]
  %s1 = inlined_call_operand.vmem [shape: f32[2,8], index: 1, kind: input, shape index: {}]
  %s2 = inlined_call_operand.vmem [shape: f32[1,32], index: 2, kind: input, shape index: {}]
  %s3 = inlined_call_operand.vmem [shape: f32[1,32], index: 3, kind: input, shape index: {}]
  %s4 = inlined_call_operand.vmem [shape: f32[2,32,96], index: 4, kind: input, shape index: {}]
  %s5 = inlined_call_operand.vmem [shape: f32[2,1,96], index: 5, kind: input, shape index: {}]
  %s6 = inlined_call_operand.vmem [shape: f32[2,32,32], index: 6, kind: input, shape index: {}]
  %s7 = inlined_call_operand.vmem [shape: f32[2,1,32], index: 7, kind: input, shape index: {}]
  %s8 = inlined_call_operand.vmem [shape: f32[2,1,32], index: 8, kind: input, shape index: {}]
  %s9 = inlined_call_operand.vmem [shape: f32[2,1,32], index: 9, kind: input, shape index: {}]
  %s10 = inlined_call_operand.vmem [shape: f32[2,32,64], index: 10, kind: input, shape index: {}]
  %s11 = inlined_call_operand.vmem [shape: f32[2,1,64], index: 11, kind: input, shape index: {}]
  %s12 = inlined_call_operand.vmem [shape: f32[2,64,32], index: 12, kind: input, shape index: {}]
  %s13 = inlined_call_operand.vmem [shape: f32[2,1,32], index: 13, kind: input, shape index: {}]
  %s14 = inlined_call_operand.vmem [shape: f32[2,1,32], index: 14, kind: input, shape index: {}]
  %s15 = inlined_call_operand.vmem [shape: f32[2,1,32], index: 15, kind: input, shape index: {}]
  %s16 = inlined_call_operand.vmem [shape: f32[32,24], index: 16, kind: input, shape index: {}]
  %s17 = inlined_call_operand.vmem [shape: f32[24,16], index: 17, kind: input, shape index: {}]
  %s18 = inlined_call_operand.hbm [shape: f32[2,16], index: 18, kind: output, shape index: {}]
  %s19 = sld [smem:[#allocation0]]
  $region89: #{hf_text_encoder_forward.1} parent=0
    _
  %s21 = ssub.s32 1, %s19
  %s22 = scalar_select 0, %s21, %s19
  $region1: #{hf_text_encoder_forward.1} parent=0
    #allocation3 [shape = 'u8[1024]{0}', space=vmem, size = 0x400, scoped, tag = 'output window, operand 0, single buffered']
    #allocation4 [shape = 's32[1]{0}', space=sflag, size = 0x4, scoped, tag = 'scoped memory for hf_text_encoder_forward.1']
    %23 = vsyncpa [#allocation4], 0
    // Predicated region
    $region2: #{hf_text_encoder_forward.1} parent=1 // pred_check
      _
    $region3: #{hf_text_encoder_forward.1} parent=1 // pred_check_branch
      %25 = sbr.rel (0) target = $region5
    $region4: #{hf_text_encoder_forward.1} parent=1 // pred_region
      _
    $region5: #{hf_text_encoder_forward.1} parent=1 // pred_fallthru
      _
    // Predicated region
    $region6: #{hf_text_encoder_forward.1} parent=1 // pred_check
      _
    $region7: #{hf_text_encoder_forward.1} parent=1 // pred_check_branch
      %27 = sbr.rel (0) target = $region9
    $region8: #{hf_text_encoder_forward.1} parent=1 // pred_region
      _
    $region9: #{hf_text_encoder_forward.1} parent=1 // pred_fallthru
      _
    // Predicated region
    $region10: #{hf_text_encoder_forward.1} parent=1 // pred_check
      _
    $region11: #{hf_text_encoder_forward.1} parent=1 // pred_check_branch
      %29 = sbr.rel (0) target = $region13
    $region12: #{hf_text_encoder_forward.1} parent=1 // pred_region
      _
    $region13: #{hf_text_encoder_forward.1} parent=1 // pred_fallthru
      _
    // Predicated region
    $region14: #{hf_text_encoder_forward.1} parent=1 // pred_check
      _
    $region15: #{hf_text_encoder_forward.1} parent=1 // pred_check_branch
      %31 = sbr.rel (0) target = $region17
    $region16: #{hf_text_encoder_forward.1} parent=1 // pred_region
      _
    $region17: #{hf_text_encoder_forward.1} parent=1 // pred_fallthru
      _
    // Predicated region
    $region18: #{hf_text_encoder_forward.1} parent=1 // pred_check
      _
    $region19: #{hf_text_encoder_forward.1} parent=1 // pred_check_branch
      %33 = sbr.rel (0) target = $region21
    $region20: #{hf_text_encoder_forward.1} parent=1 // pred_region
      _
    $region21: #{hf_text_encoder_forward.1} parent=1 // pred_fallthru
      _
    // Predicated region
    $region22: #{hf_text_encoder_forward.1} parent=1 // pred_check
      _
    $region23: #{hf_text_encoder_forward.1} parent=1 // pred_check_branch
      %35 = sbr.rel (0) target = $region25
    $region24: #{hf_text_encoder_forward.1} parent=1 // pred_region
      _
    $region25: #{hf_text_encoder_forward.1} parent=1 // pred_fallthru
      _
    // Predicated region
    $region26: #{hf_text_encoder_forward.1} parent=1 // pred_check
      _
    $region27: #{hf_text_encoder_forward.1} parent=1 // pred_check_branch
      %37 = sbr.rel (0) target = $region29
    $region28: #{hf_text_encoder_forward.1} parent=1 // pred_region
      _
    $region29: #{hf_text_encoder_forward.1} parent=1 // pred_fallthru
      _
    // Predicated region
    $region30: #{hf_text_encoder_forward.1} parent=1 // pred_check
      _
    $region31: #{hf_text_encoder_forward.1} parent=1 // pred_check_branch
      %39 = sbr.rel (0) target = $region33
    $region32: #{hf_text_encoder_forward.1} parent=1 // pred_region
      _
    $region33: #{hf_text_encoder_forward.1} parent=1 // pred_fallthru
      _
    // Predicated region
    $region34: #{hf_text_encoder_forward.1} parent=1 // pred_check
      _
    $region35: #{hf_text_encoder_forward.1} parent=1 // pred_check_branch
      %41 = sbr.rel (0) target = $region37
    $region36: #{hf_text_encoder_forward.1} parent=1 // pred_region
      _
    $region37: #{hf_text_encoder_forward.1} parent=1 // pred_fallthru
      _
    // Predicated region
    $region38: #{hf_text_encoder_forward.1} parent=1 // pred_check
      _
    $region39: #{hf_text_encoder_forward.1} parent=1 // pred_check_branch
      %43 = sbr.rel (0) target = $region41
    $region40: #{hf_text_encoder_forward.1} parent=1 // pred_region
      _
    $region41: #{hf_text_encoder_forward.1} parent=1 // pred_fallthru
      _
    // Predicated region
    $region42: #{hf_text_encoder_forward.1} parent=1 // pred_check
      _
    $region43: #{hf_text_encoder_forward.1} parent=1 // pred_check_branch
      %45 = sbr.rel (0) target = $region45
    $region44: #{hf_text_encoder_forward.1} parent=1 // pred_region
      _
    $region45: #{hf_text_encoder_forward.1} parent=1 // pred_fallthru
      _
    // Predicated region
    $region46: #{hf_text_encoder_forward.1} parent=1 // pred_check
      _
    $region47: #{hf_text_encoder_forward.1} parent=1 // pred_check_branch
      %47 = sbr.rel (0) target = $region49
    $region48: #{hf_text_encoder_forward.1} parent=1 // pred_region
      _
    $region49: #{hf_text_encoder_forward.1} parent=1 // pred_fallthru
      _
    // Predicated region
    $region50: #{hf_text_encoder_forward.1} parent=1 // pred_check
      _
    $region51: #{hf_text_encoder_forward.1} parent=1 // pred_check_branch
      %49 = sbr.rel (0) target = $region53
    $region52: #{hf_text_encoder_forward.1} parent=1 // pred_region
      _
    $region53: #{hf_text_encoder_forward.1} parent=1 // pred_fallthru
      _
    // Predicated region
    $region54: #{hf_text_encoder_forward.1} parent=1 // pred_check
      _
    $region55: #{hf_text_encoder_forward.1} parent=1 // pred_check_branch
      %51 = sbr.rel (0) target = $region57
    $region56: #{hf_text_encoder_forward.1} parent=1 // pred_region
      _
    $region57: #{hf_text_encoder_forward.1} parent=1 // pred_fallthru
      _
    // Predicated region
    $region58: #{hf_text_encoder_forward.1} parent=1 // pred_check
      _
    $region59: #{hf_text_encoder_forward.1} parent=1 // pred_check_branch
      %53 = sbr.rel (0) target = $region61
    $region60: #{hf_text_encoder_forward.1} parent=1 // pred_region
      _
    $region61: #{hf_text_encoder_forward.1} parent=1 // pred_fallthru
      _
    // Predicated region
    $region62: #{hf_text_encoder_forward.1} parent=1 // pred_check
      _
    $region63: #{hf_text_encoder_forward.1} parent=1 // pred_check_branch
      %55 = sbr.rel (0) target = $region65
    $region64: #{hf_text_encoder_forward.1} parent=1 // pred_region
      _
    $region65: #{hf_text_encoder_forward.1} parent=1 // pred_fallthru
      _
    // Predicated region
    $region66: #{hf_text_encoder_forward.1} parent=1 // pred_check
      _
    $region67: #{hf_text_encoder_forward.1} parent=1 // pred_check_branch
      %57 = sbr.rel (0) target = $region69
    $region68: #{hf_text_encoder_forward.1} parent=1 // pred_region
      _
    $region69: #{hf_text_encoder_forward.1} parent=1 // pred_fallthru
      _
    // Predicated region
    $region70: #{hf_text_encoder_forward.1} parent=1 // pred_check
      _
    $region71: #{hf_text_encoder_forward.1} parent=1 // pred_check_branch
      %59 = sbr.rel (0) target = $region73
    $region72: #{hf_text_encoder_forward.1} parent=1 // pred_region
      _
    $region73: #{hf_text_encoder_forward.1} parent=1 // pred_fallthru
      _
    %v60 = vld [vmem:[%s0] sm:$0xff]
    %v61 = vld [vmem:[%s0 + $0x8] sm:$0xff]
    %v62 = vld [vmem:[%s2] sm:$0x1]
    %v63 = vld [vmem:[%s3] sm:$0x1]
    %vm64 = vcmask 261120
    %v65 = vsel %vm64, %v60, 0.0
    %66 = vadd.xlane.f32.xlu0 %v65
    %v67 = vpop.xlane.xlu0 %66
    %v68 = vsel %vm64, %v61, 0.0
    %69 = vadd.xlane.f32.xlu0 %v68
    %v70 = vpop.xlane.xlu0 %69
    %v71 = vrcp.pop 32.0
    %v72 = vmul.f32 %v67, %v71
    %v73 = vmul.f32 %v70, %v71
    %v74 = vsub.f32 %v60, %v72
    %v75 = vsub.f32 %v61, %v73
    %v76 = vmul.f32 %v74, %v74
    %v77 = vmul.f32 %v75, %v75
    %v78 = vsel %vm64, %v76, 0.0
    %79 = vadd.xlane.f32.xlu0 %v78
    %v80 = vpop.xlane.xlu0 %79
    %v81 = vsel %vm64, %v77, 0.0
    %82 = vadd.xlane.f32.xlu0 %v81
    %v83 = vpop.xlane.xlu0 %82
    %v84 = vmul.f32 %v80, %v71
    %v85 = vmul.f32 %v83, %v71
    %v86 = vadd.f32 %v84, 1e-12
    %v87 = vadd.f32 %v85, 1e-12
    %v88 = vrsqrt.pop %v86
    %v89 = vrsqrt.pop %v87
    %v90 = vmul.f32 %v74, %v88
    %v91 = vmul.f32 %v75, %v89
    %v93 = vlaneseq
    %v94 = vshrl.u32 %v93, 7
    %v95 = vsub.s32 0, %v94
    %v96 = vrot.slane %v62, %v95
    %v98 = vmul.f32 %v90, %v96
    %v99 = vmul.f32 %v91, %v96
    %v101 = vlaneseq
    %v102 = vshrl.u32 %v101, 7
    %v103 = vsub.s32 0, %v102
    %v104 = vrot.slane %v63, %v103
    %v106 = vadd.f32 %v98, %v104
    %v107 = vadd.f32 %v99, %v104
    %108 = vst.msk [vmem:[#allocation2] sm:$0xff] %vm64, %v106
    %109 = vst.msk [vmem:[#allocation2 + $0x8] sm:$0xff] %vm64, %v107
    %v110 = vld [vmem:[%s1] sm:$0x3]
    %v111 = vsub.f32 %v110, 1.0
    %v112 = vmul.f32 %v111, 1e+09
    %v115 = vunpack.c.l.s4 1966171168
    %v116 = vunpack.c.0.s8 %v115
    %v117 = vlaneseq
    %v118 = vshrl.u32 %v117, 7
    %v119 = vsub.s32 %v116, %v118
    %v120 = vrot.slane %v112, %v119
    %v121 = vcombine.high %v120, %v120
    %v123 = vunpack.c.l.s4 1966171168
    %v124 = vunpack.c.0.s8 %v123
    %v125 = vlaneseq
    %v126 = vshrl.u32 %v125, 7
    %v127 = vsub.s32 %v124, %v126
    %v128 = vrot.slane %v120, %v127
    %v130 = vunpack.c.l.s4 1966171168
    %v131 = vunpack.c.0.s8 %v130
    %v132 = vlaneseq
    %v133 = vshrl.u32 %v132, 7
    %v134 = vsub.s32 %v131, %v133
    %v135 = vrot.slane %v121, %v134
    loop: start=0, step=1, limit=2
    $region74: #{hf_text_encoder_forward.1} parent=1 // loop_pre_header
      _
    $region75: #{hf_text_encoder_forward.1} parent=1 // loop_header
      %s137 = sphi 0, %s141
      %p138 = scmp.ge.s32.totalorder %s137, 2
    $region76: #{hf_text_encoder_forward.1} parent=1 // loop_header_branch
      %140 = sbr.rel (%p138) target = $region80
    $region77: #{hf_text_encoder_forward.1} parent=1 // loop_body
      %v142 = vld [vmem:[#allocation2] sm:$0xff]
      %v143 = vld [vmem:[#allocation2 + $0x8] sm:$0xff]
      %s144 = smul.u32 %s137, 32
      %s145 = scalar_lea.vmem %s4, %s144
      %v146 = vld [vmem:[%s145] sm:$0xff]
      %v147 = vld [vmem:[%s145 + $0x8] sm:$0xff]
      %v148 = vld [vmem:[%s145 + $0x10] sm:$0xff]
      %v149 = vld [vmem:[%s145 + $0x18] sm:$0xff]
      %s150 = scalar_lea.vmem %s5, %s137
      %v151 = vld [vmem:[%s150] sm:$0x1]
      %v153 = vlaneseq
      %v154 = vshrl.u32 %v153, 7
      %v155 = vsub.s32 0, %v154
      %v156 = vrot.slane %v151, %v155
      %v159 = vsel %vm64, %v142, 0
      %v162 = vsel %vm64, %v143, 0
      %164 = vmatprep.subr.mxu0 0.0
      %165 = vmatpush1.msra.mxu0 %v146
      %166 = vmatprep.subr.mxu0 0.0
      %167 = vmatpush1.msra.mxu0 %v147
      %168 = vmatprep.subr.mxu0 0.0
      %169 = vmatpush1.msra.mxu0 %v148
      %170 = vmatprep.subr.mxu0 0.0
      %171 = vmatpush1.msra.mxu0 %v149
      %172 = vmatprep.subr.mxu0 0.0
      %173 = vmatpush1.msra.mxu0 0.0
      %174 = vmatprep.subr.mxu0 0.0
      %175 = vmatpush1.msra.mxu0 0.0
      %176 = vmatprep.subr.mxu0 0.0
      %177 = vmatpush1.msra.mxu0 0.0
      %178 = vmatprep.subr.mxu0 0.0
      %179 = vmatpush1.msra.mxu0 0.0
      %180 = vmatprep.subr.mxu0 0.0
      %181 = vmatpush1.msra.mxu0 0.0
      %182 = vmatprep.subr.mxu0 0.0
      %183 = vmatpush1.msra.mxu0 0.0
      %184 = vmatprep.subr.mxu0 0.0
      %185 = vmatpush1.msra.mxu0 0.0
      %186 = vmatprep.subr.mxu0 0.0
      %187 = vmatpush1.msra.mxu0 0.0
      %188 = vmatprep.subr.mxu0 0.0
      %189 = vmatpush1.msra.mxu0 0.0
      %190 = vmatprep.subr.mxu0 0.0
      %191 = vmatpush1.msra.mxu0 0.0
      %192 = vmatprep.subr.mxu0 0.0
      %193 = vmatpush1.msra.mxu0 0.0
      %194 = vmatprep.subr.mxu0 0.0
      %195 = vmatpush1.msra.mxu0 0.0
      %196 = vmatprep.subr.mxu0 0.0
      %197 = vmatpush1.msra.mxu0 0.0
      %198 = vmatprep.subr.mxu0 0.0
      %199 = vmatpush1.msra.mxu0 0.0
      %200 = vmatprep.subr.mxu0 0.0
      %201 = vmatpush1.msra.mxu0 0.0
      %202 = vmatprep.subr.mxu0 0.0
      %203 = vmatpush1.msra.mxu0 0.0
      %204 = vmatprep.subr.mxu0 0.0
      %205 = vmatpush1.msra.mxu0 0.0
      %206 = vmatprep.subr.mxu0 0.0
      %207 = vmatpush1.msra.mxu0 0.0
      %208 = vmatprep.subr.mxu0 0.0
      %209 = vmatpush1.msra.mxu0 0.0
      %210 = vmatprep.subr.mxu0 0.0
      %211 = vmatpush1.msra.mxu0 0.0
      %212 = vmatprep.subr.mxu0 0.0
      %213 = vmatpush1.msra.mxu0 0.0
      %214 = vmatprep.subr.mxu0 0.0
      %215 = vmatpush1.msra.mxu0 0.0
      %216 = vmatprep.subr.mxu0 0.0
      %217 = vmatpush1.msra.mxu0 0.0
      %218 = vmatprep.subr.mxu0 0.0
      %219 = vmatpush1.msra.mxu0 0.0
      %220 = vmatprep.subr.mxu0 0.0
      %221 = vmatpush1.msra.mxu0 0.0
      %222 = vmatprep.subr.mxu0 0.0
      %223 = vmatpush1.msra.mxu0 0.0
      %224 = vmatprep.subr.mxu0 0.0
      %225 = vmatpush1.msra.mxu0 0.0
      %226 = vmatprep.subr.mxu0 0.0
      %227 = vmatpush1.msra.mxu0 0.0
      %228 = vmatprep.mubr.f32.mxu0 0.0
      %229 = vmatmul.mubr.f32.gmra.mrb[0].mxu0 %v159
      %v230 = vpop.f32.mrb[0].mxu0
      %v231 = vadd.f32 %v156, %v230
      %v232 = vpop.f32.mrb[0].mxu0
      %233 = vmatprep.mubr.f32.mxu0 0.0
      %234 = vmatmul.mubr.f32.gmra.mrb[0].mxu0 %v162
      %v235 = vpop.f32.mrb[0].mxu0
      %v236 = vadd.f32 %v156, %v235
      %v237 = vpop.f32.mrb[0].mxu0
      %238 = vdwg.mxu0
      %s239 = scalar_lea.vmem %s6, %s144
      %v240 = vld [vmem:[%s239] sm:$0xff]
      %v241 = vld [vmem:[%s239 + $0x8] sm:$0xff]
      %v242 = vld [vmem:[%s239 + $0x10] sm:$0xff]
      %v243 = vld [vmem:[%s239 + $0x18] sm:$0xff]
      %245 = vrot.lane.b32.xlu0 %v231, 96
      %v246 = vpop.permute.xlu0 %245
      %vm247 = vcmask 130048
      %v248 = vsel %vm247, %v231, 0
      %v250 = vsel %vm247, %v246, 0
      %252 = vmatprep.subr.mxu0 0.0
      %253 = vmatpush1.xpose.msra.mxu0 %v250
      %254 = vmatprep.subr.mxu0 0.0
      %255 = vmatpush1.xpose.msra.mxu0 0.0
      %256 = vmatprep.subr.mxu0 0.0
      %257 = vmatpush1.xpose.msra.mxu0 0.0
      %258 = vmatprep.subr.mxu0 0.0
      %259 = vmatpush1.xpose.msra.mxu0 0.0
      %260 = vmatprep.subr.mxu0 0.0
      %261 = vmatpush1.xpose.msra.mxu0 0.0
      %262 = vmatprep.subr.mxu0 0.0
      %263 = vmatpush1.xpose.msra.mxu0 0.0
      %264 = vmatprep.subr.mxu0 0.0
      %265 = vmatpush1.xpose.msra.mxu0 0.0
      %266 = vmatprep.subr.mxu0 0.0
      %267 = vmatpush1.xpose.msra.mxu0 0.0
      %268 = vmatprep.subr.mxu0 0.0
      %269 = vmatpush1.xpose.msra.mxu0 0.0
      %270 = vmatprep.subr.mxu0 0.0
      %271 = vmatpush1.xpose.msra.mxu0 0.0
      %272 = vmatprep.subr.mxu0 0.0
      %273 = vmatpush1.xpose.msra.mxu0 0.0
      %274 = vmatprep.subr.mxu0 0.0
      %275 = vmatpush1.xpose.msra.mxu0 0.0
      %276 = vmatprep.subr.mxu0 0.0
      %277 = vmatpush1.xpose.msra.mxu0 0.0
      %278 = vmatprep.subr.mxu0 0.0
      %279 = vmatpush1.xpose.msra.mxu0 0.0
      %280 = vmatprep.subr.mxu0 0.0
      %281 = vmatpush1.xpose.msra.mxu0 0.0
      %282 = vmatprep.subr.mxu0 0.0
      %283 = vmatpush1.xpose.msra.mxu0 0.0
      %284 = vmatprep.subr.mxu0 0.0
      %285 = vmatpush1.xpose.msra.mxu0 0.0
      %286 = vmatprep.subr.mxu0 0.0
      %287 = vmatpush1.xpose.msra.mxu0 0.0
      %288 = vmatprep.subr.mxu0 0.0
      %289 = vmatpush1.xpose.msra.mxu0 0.0
      %290 = vmatprep.subr.mxu0 0.0
      %291 = vmatpush1.xpose.msra.mxu0 0.0
      %292 = vmatprep.subr.mxu0 0.0
      %293 = vmatpush1.xpose.msra.mxu0 0.0
      %294 = vmatprep.subr.mxu0 0.0
      %295 = vmatpush1.xpose.msra.mxu0 0.0
      %296 = vmatprep.subr.mxu0 0.0
      %297 = vmatpush1.xpose.msra.mxu0 0.0
      %298 = vmatprep.subr.mxu0 0.0
      %299 = vmatpush1.xpose.msra.mxu0 0.0
      %300 = vmatprep.subr.mxu0 0.0
      %301 = vmatpush1.xpose.msra.mxu0 0.0
      %302 = vmatprep.subr.mxu0 0.0
      %303 = vmatpush1.xpose.msra.mxu0 0.0
      %304 = vmatprep.subr.mxu0 0.0
      %305 = vmatpush1.xpose.msra.mxu0 0.0
      %306 = vmatprep.subr.mxu0 0.0
      %307 = vmatpush1.xpose.msra.mxu0 0.0
      %308 = vmatprep.subr.mxu0 0.0
      %309 = vmatpush1.xpose.msra.mxu0 0.0
      %310 = vmatprep.subr.mxu0 0.0
      %311 = vmatpush1.xpose.msra.mxu0 0.0
      %312 = vmatprep.subr.mxu0 0.0
      %313 = vmatpush1.xpose.msra.mxu0 0.0
      %314 = vmatprep.subr.mxu0 0.0
      %315 = vmatpush1.xpose.msra.mxu0 0.0
      %316 = vmatprep.mubr.f32.mxu0 0.0
      %317 = vmatmul.mubr.f32.gmra.mrb[0].mxu0 %v248
      %v318 = vpop.f32.mrb[0].mxu0
      %v319 = vadd.f32 0.0, %v318
      %v320 = vpop.f32.mrb[0].mxu0
      %321 = vdwg.mxu0
      %323 = vrot.lane.b32.xlu0 %v236, 96
      %v324 = vpop.permute.xlu0 %323
      %v325 = vsel %vm247, %v236, 0
      %v327 = vsel %vm247, %v324, 0
      %329 = vmatprep.subr.mxu0 0.0
      %330 = vmatpush1.xpose.msra.mxu0 %v327
      %331 = vmatprep.subr.mxu0 0.0
      %332 = vmatpush1.xpose.msra.mxu0 0.0
      %333 = vmatprep.subr.mxu0 0.0
      %334 = vmatpush1.xpose.msra.mxu0 0.0
      %335 = vmatprep.subr.mxu0 0.0
      %336 = vmatpush1.xpose.msra.mxu0 0.0
      %337 = vmatprep.subr.mxu0 0.0
      %338 = vmatpush1.xpose.msra.mxu0 0.0
      %339 = vmatprep.subr.mxu0 0.0
      %340 = vmatpush1.xpose.msra.mxu0 0.0
      %341 = vmatprep.subr.mxu0 0.0
      %342 = vmatpush1.xpose.msra.mxu0 0.0
      %343 = vmatprep.subr.mxu0 0.0
      %344 = vmatpush1.xpose.msra.mxu0 0.0
      %345 = vmatprep.subr.mxu0 0.0
      %346 = vmatpush1.xpose.msra.mxu0 0.0
      %347 = vmatprep.subr.mxu0 0.0
      %348 = vmatpush1.xpose.msra.mxu0 0.0
      %349 = vmatprep.subr.mxu0 0.0
      %350 = vmatpush1.xpose.msra.mxu0 0.0
      %351 = vmatprep.subr.mxu0 0.0
      %352 = vmatpush1.xpose.msra.mxu0 0.0
      %353 = vmatprep.subr.mxu0 0.0
      %354 = vmatpush1.xpose.msra.mxu0 0.0
      %355 = vmatprep.subr.mxu0 0.0
      %356 = vmatpush1.xpose.msra.mxu0 0.0
      %357 = vmatprep.subr.mxu0 0.0
      %358 = vmatpush1.xpose.msra.mxu0 0.0
      %359 = vmatprep.subr.mxu0 0.0
      %360 = vmatpush1.xpose.msra.mxu0 0.0
      %361 = vmatprep.subr.mxu0 0.0
      %362 = vmatpush1.xpose.msra.mxu0 0.0
      %363 = vmatprep.subr.mxu0 0.0
      %364 = vmatpush1.xpose.msra.mxu0 0.0
      %365 = vmatprep.subr.mxu0 0.0
      %366 = vmatpush1.xpose.msra.mxu0 0.0
      %367 = vmatprep.subr.mxu0 0.0
      %368 = vmatpush1.xpose.msra.mxu0 0.0
      %369 = vmatprep.subr.mxu0 0.0
      %370 = vmatpush1.xpose.msra.mxu0 0.0
      %371 = vmatprep.subr.mxu0 0.0
      %372 = vmatpush1.xpose.msra.mxu0 0.0
      %373 = vmatprep.subr.mxu0 0.0
      %374 = vmatpush1.xpose.msra.mxu0 0.0
      %375 = vmatprep.subr.mxu0 0.0
      %376 = vmatpush1.xpose.msra.mxu0 0.0
      %377 = vmatprep.subr.mxu0 0.0
      %378 = vmatpush1.xpose.msra.mxu0 0.0
      %379 = vmatprep.subr.mxu0 0.0
      %380 = vmatpush1.xpose.msra.mxu0 0.0
      %381 = vmatprep.subr.mxu0 0.0
      %382 = vmatpush1.xpose.msra.mxu0 0.0
      %383 = vmatprep.subr.mxu0 0.0
      %384 = vmatpush1.xpose.msra.mxu0 0.0
      %385 = vmatprep.subr.mxu0 0.0
      %386 = vmatpush1.xpose.msra.mxu0 0.0
      %387 = vmatprep.subr.mxu0 0.0
      %388 = vmatpush1.xpose.msra.mxu0 0.0
      %389 = vmatprep.subr.mxu0 0.0
      %390 = vmatpush1.xpose.msra.mxu0 0.0
      %391 = vmatprep.subr.mxu0 0.0
      %392 = vmatpush1.xpose.msra.mxu0 0.0
      %393 = vmatprep.mubr.f32.mxu0 0.0
      %394 = vmatmul.mubr.f32.gmra.mrb[0].mxu0 %v325
      %v395 = vpop.f32.mrb[0].mxu0
      %v396 = vadd.f32 0.0, %v395
      %v397 = vpop.f32.mrb[0].mxu0
      %398 = vdwg.mxu0
      %v399 = vmul.f32 %v319, 0.25
      %v400 = vmul.f32 %v396, 0.25
      %v401 = vlaneseq
      %v402 = vshrl.u32 %v401, 7
      %v403 = vsub.s32 0, %v402
      %v404 = vrot.slane %v128, %v403
      %v405 = vlaneseq
      %v406 = vshrl.u32 %v405, 7
      %v407 = vsub.s32 0, %v406
      %v408 = vrot.slane %v135, %v407
      %v411 = vadd.f32 %v399, %v404
      %v412 = vadd.f32 %v400, %v408
      %vm413 = vcmask 64512
      %v414 = vsel %vm413, %v411, -inf
      %415 = vmax.xlane.f32.xlu0 %v414
      %v416 = vpop.xlane.xlu0 %415
      %v417 = vsel %vm413, %v412, -inf
      %418 = vmax.xlane.f32.xlu0 %v417
      %v419 = vpop.xlane.xlu0 %418
      %v420 = vsub.f32 %v411, %v416
      %v421 = vsub.f32 %v412, %v419
      %v422 = vmul.f32 %v420, 1.442695
      %v423 = vpow.pop %v422
      %v424 = vmul.f32 %v421, 1.442695
      %v425 = vpow.pop %v424
      %v426 = vsel %vm413, %v423, 0.0
      %427 = vadd.xlane.f32.xlu0 %v426
      %v428 = vpop.xlane.xlu0 %427
      %v429 = vsel %vm413, %v425, 0.0
      %430 = vadd.xlane.f32.xlu0 %v429
      %v431 = vpop.xlane.xlu0 %430
      %v432 = vrcp.pop %v428
      %v433 = vrcp.pop %v431
      %v434 = vmul.f32 %v423, %v432
      %v435 = vmul.f32 %v425, %v433
      %436 = vrot.lane.b32.xlu0 %v231, 64
      %v437 = vpop.permute.xlu0 %436
      %v440 = vsel %vm413, %v434, 0
      %442 = vmatprep.subr.mxu0 0.0
      %443 = vmatpush1.msra.mxu0 %v437
      %444 = vmatprep.subr.mxu0 0.0
      %445 = vmatpush1.msra.mxu0 0.0
      %446 = vmatprep.subr.mxu0 0.0
      %447 = vmatpush1.msra.mxu0 0.0
      %448 = vmatprep.subr.mxu0 0.0
      %449 = vmatpush1.msra.mxu0 0.0
      %450 = vmatprep.subr.mxu0 0.0
      %451 = vmatpush1.msra.mxu0 0.0
      %452 = vmatprep.subr.mxu0 0.0
      %453 = vmatpush1.msra.mxu0 0.0
      %454 = vmatprep.subr.mxu0 0.0
      %455 = vmatpush1.msra.mxu0 0.0
      %456 = vmatprep.subr.mxu0 0.0
      %457 = vmatpush1.msra.mxu0 0.0
      %458 = vmatprep.subr.mxu0 0.0
      %459 = vmatpush1.msra.mxu0 0.0
      %460 = vmatprep.subr.mxu0 0.0
      %461 = vmatpush1.msra.mxu0 0.0
      %462 = vmatprep.subr.mxu0 0.0
      %463 = vmatpush1.msra.mxu0 0.0
      %464 = vmatprep.subr.mxu0 0.0
      %465 = vmatpush1.msra.mxu0 0.0
      %466 = vmatprep.subr.mxu0 0.0
      %467 = vmatpush1.msra.mxu0 0.0
      %468 = vmatprep.subr.mxu0 0.0
      %469 = vmatpush1.msra.mxu0 0.0
      %470 = vmatprep.subr.mxu0 0.0
      %471 = vmatpush1.msra.mxu0 0.0
      %472 = vmatprep.subr.mxu0 0.0
      %473 = vmatpush1.msra.mxu0 0.0
      %474 = vmatprep.subr.mxu0 0.0
      %475 = vmatpush1.msra.mxu0 0.0
      %476 = vmatprep.subr.mxu0 0.0
      %477 = vmatpush1.msra.mxu0 0.0
      %478 = vmatprep.subr.mxu0 0.0
      %479 = vmatpush1.msra.mxu0 0.0
      %480 = vmatprep.subr.mxu0 0.0
      %481 = vmatpush1.msra.mxu0 0.0
      %482 = vmatprep.subr.mxu0 0.0
      %483 = vmatpush1.msra.mxu0 0.0
      %484 = vmatprep.subr.mxu0 0.0
      %485 = vmatpush1.msra.mxu0 0.0
      %486 = vmatprep.subr.mxu0 0.0
      %487 = vmatpush1.msra.mxu0 0.0
      %488 = vmatprep.subr.mxu0 0.0
      %489 = vmatpush1.msra.mxu0 0.0
      %490 = vmatprep.subr.mxu0 0.0
      %491 = vmatpush1.msra.mxu0 0.0
      %492 = vmatprep.subr.mxu0 0.0
      %493 = vmatpush1.msra.mxu0 0.0
      %494 = vmatprep.subr.mxu0 0.0
      %495 = vmatpush1.msra.mxu0 0.0
      %496 = vmatprep.subr.mxu0 0.0
      %497 = vmatpush1.msra.mxu0 0.0
      %498 = vmatprep.subr.mxu0 0.0
      %499 = vmatpush1.msra.mxu0 0.0
      %500 = vmatprep.subr.mxu0 0.0
      %501 = vmatpush1.msra.mxu0 0.0
      %502 = vmatprep.subr.mxu0 0.0
      %503 = vmatpush1.msra.mxu0 0.0
      %504 = vmatprep.subr.mxu0 0.0
      %505 = vmatpush1.msra.mxu0 0.0
      %506 = vmatprep.mubr.f32.mxu0 0.0
      %507 = vmatmul.mubr.f32.gmra.mrb[0].mxu0 %v440
      %v508 = vpop.f32.mrb[0].mxu0
      %v509 = vadd.f32 0.0, %v508
      %v510 = vpop.f32.mrb[0].mxu0
      %511 = vdwg.mxu0
      %512 = vrot.lane.b32.xlu0 %v236, 64
      %v513 = vpop.permute.xlu0 %512
      %v516 = vsel %vm413, %v435, 0
      %518 = vmatprep.subr.mxu0 0.0
      %519 = vmatpush1.msra.mxu0 %v513
      %520 = vmatprep.subr.mxu0 0.0
      %521 = vmatpush1.msra.mxu0 0.0
      %522 = vmatprep.subr.mxu0 0.0
      %523 = vmatpush1.msra.mxu0 0.0
      %524 = vmatprep.subr.mxu0 0.0
      %525 = vmatpush1.msra.mxu0 0.0
      %526 = vmatprep.subr.mxu0 0.0
      %527 = vmatpush1.msra.mxu0 0.0
      %528 = vmatprep.subr.mxu0 0.0
      %529 = vmatpush1.msra.mxu0 0.0
      %530 = vmatprep.subr.mxu0 0.0
      %531 = vmatpush1.msra.mxu0 0.0
      %532 = vmatprep.subr.mxu0 0.0
      %533 = vmatpush1.msra.mxu0 0.0
      %534 = vmatprep.subr.mxu0 0.0
      %535 = vmatpush1.msra.mxu0 0.0
      %536 = vmatprep.subr.mxu0 0.0
      %537 = vmatpush1.msra.mxu0 0.0
      %538 = vmatprep.subr.mxu0 0.0
      %539 = vmatpush1.msra.mxu0 0.0
      %540 = vmatprep.subr.mxu0 0.0
      %541 = vmatpush1.msra.mxu0 0.0
      %542 = vmatprep.subr.mxu0 0.0
      %543 = vmatpush1.msra.mxu0 0.0
      %544 = vmatprep.subr.mxu0 0.0
      %545 = vmatpush1.msra.mxu0 0.0
      %546 = vmatprep.subr.mxu0 0.0
      %547 = vmatpush1.msra.mxu0 0.0
      %548 = vmatprep.subr.mxu0 0.0
      %549 = vmatpush1.msra.mxu0 0.0
      %550 = vmatprep.subr.mxu0 0.0
      %551 = vmatpush1.msra.mxu0 0.0
      %552 = vmatprep.subr.mxu0 0.0
      %553 = vmatpush1.msra.mxu0 0.0
      %554 = vmatprep.subr.mxu0 0.0
      %555 = vmatpush1.msra.mxu0 0.0
      %556 = vmatprep.subr.mxu0 0.0
      %557 = vmatpush1.msra.mxu0 0.0
      %558 = vmatprep.subr.mxu0 0.0
      %559 = vmatpush1.msra.mxu0 0.0
      %560 = vmatprep.subr.mxu0 0.0
      %561 = vmatpush1.msra.mxu0 0.0
      %562 = vmatprep.subr.mxu0 0.0
      %563 = vmatpush1.msra.mxu0 0.0
      %564 = vmatprep.subr.mxu0 0.0
      %565 = vmatpush1.msra.mxu0 0.0
      %566 = vmatprep.subr.mxu0 0.0
      %567 = vmatpush1.msra.mxu0 0.0
      %568 = vmatprep.subr.mxu0 0.0
      %569 = vmatpush1.msra.mxu0 0.0
      %570 = vmatprep.subr.mxu0 0.0
      %571 = vmatpush1.msra.mxu0 0.0
      %572 = vmatprep.subr.mxu0 0.0
      %573 = vmatpush1.msra.mxu0 0.0
      %574 = vmatprep.subr.mxu0 0.0
      %575 = vmatpush1.msra.mxu0 0.0
      %576 = vmatprep.subr.mxu0 0.0
      %577 = vmatpush1.msra.mxu0 0.0
      %578 = vmatprep.subr.mxu0 0.0
      %579 = vmatpush1.msra.mxu0 0.0
      %580 = vmatprep.subr.mxu0 0.0
      %581 = vmatpush1.msra.mxu0 0.0
      %582 = vmatprep.mubr.f32.mxu0 0.0
      %583 = vmatmul.mubr.f32.gmra.mrb[0].mxu0 %v516
      %v584 = vpop.f32.mrb[0].mxu0
      %v585 = vadd.f32 0.0, %v584
      %v586 = vpop.f32.mrb[0].mxu0
      %587 = vdwg.mxu0
      %588 = vrot.lane.b32.xlu0 %v231, 112
      %v589 = vpop.permute.xlu0 %588
      %590 = vrot.lane.b32.xlu0 %v231, 80
      %v591 = vpop.permute.xlu0 %590
      %v592 = vsel %vm247, %v589, 0
      %v594 = vsel %vm247, %v591, 0
      %596 = vmatprep.subr.mxu0 0.0
      %597 = vmatpush1.xpose.msra.mxu0 %v594
      %598 = vmatprep.subr.mxu0 0.0
      %599 = vmatpush1.xpose.msra.mxu0 0.0
      %600 = vmatprep.subr.mxu0 0.0
      %601 = vmatpush1.xpose.msra.mxu0 0.0
      %602 = vmatprep.subr.mxu0 0.0
      %603 = vmatpush1.xpose.msra.mxu0 0.0
      %604 = vmatprep.subr.mxu0 0.0
      %605 = vmatpush1.xpose.msra.mxu0 0.0
      %606 = vmatprep.subr.mxu0 0.0
      %607 = vmatpush1.xpose.msra.mxu0 0.0
      %608 = vmatprep.subr.mxu0 0.0
      %609 = vmatpush1.xpose.msra.mxu0 0.0
      %610 = vmatprep.subr.mxu0 0.0
      %611 = vmatpush1.xpose.msra.mxu0 0.0
      %612 = vmatprep.subr.mxu0 0.0
      %613 = vmatpush1.xpose.msra.mxu0 0.0
      %614 = vmatprep.subr.mxu0 0.0
      %615 = vmatpush1.xpose.msra.mxu0 0.0
      %616 = vmatprep.subr.mxu0 0.0
      %617 = vmatpush1.xpose.msra.mxu0 0.0
      %618 = vmatprep.subr.mxu0 0.0
      %619 = vmatpush1.xpose.msra.mxu0 0.0
      %620 = vmatprep.subr.mxu0 0.0
      %621 = vmatpush1.xpose.msra.mxu0 0.0
      %622 = vmatprep.subr.mxu0 0.0
      %623 = vmatpush1.xpose.msra.mxu0 0.0
      %624 = vmatprep.subr.mxu0 0.0
      %625 = vmatpush1.xpose.msra.mxu0 0.0
      %626 = vmatprep.subr.mxu0 0.0
      %627 = vmatpush1.xpose.msra.mxu0 0.0
      %628 = vmatprep.subr.mxu0 0.0
      %629 = vmatpush1.xpose.msra.mxu0 0.0
      %630 = vmatprep.subr.mxu0 0.0
      %631 = vmatpush1.xpose.msra.mxu0 0.0
      %632 = vmatprep.subr.mxu0 0.0
      %633 = vmatpush1.xpose.msra.mxu0 0.0
      %634 = vmatprep.subr.mxu0 0.0
      %635 = vmatpush1.xpose.msra.mxu0 0.0
      %636 = vmatprep.subr.mxu0 0.0
      %637 = vmatpush1.xpose.msra.mxu0 0.0
      %638 = vmatprep.subr.mxu0 0.0
      %639 = vmatpush1.xpose.msra.mxu0 0.0
      %640 = vmatprep.subr.mxu0 0.0
      %641 = vmatpush1.xpose.msra.mxu0 0.0
      %642 = vmatprep.subr.mxu0 0.0
      %643 = vmatpush1.xpose.msra.mxu0 0.0
      %644 = vmatprep.subr.mxu0 0.0
      %645 = vmatpush1.xpose.msra.mxu0 0.0
      %646 = vmatprep.subr.mxu0 0.0
      %647 = vmatpush1.xpose.msra.mxu0 0.0
      %648 = vmatprep.subr.mxu0 0.0
      %649 = vmatpush1.xpose.msra.mxu0 0.0
      %650 = vmatprep.subr.mxu0 0.0
      %651 = vmatpush1.xpose.msra.mxu0 0.0
      %652 = vmatprep.subr.mxu0 0.0
      %653 = vmatpush1.xpose.msra.mxu0 0.0
      %654 = vmatprep.subr.mxu0 0.0
      %655 = vmatpush1.xpose.msra.mxu0 0.0
      %656 = vmatprep.subr.mxu0 0.0
      %657 = vmatpush1.xpose.msra.mxu0 0.0
      %658 = vmatprep.subr.mxu0 0.0
      %659 = vmatpush1.xpose.msra.mxu0 0.0
      %660 = vmatprep.mubr.f32.mxu0 0.0
      %661 = vmatmul.mubr.f32.gmra.mrb[0].mxu0 %v592
      %v662 = vpop.f32.mrb[0].mxu0
      %v663 = vadd.f32 0.0, %v662
      %v664 = vpop.f32.mrb[0].mxu0
      %665 = vdwg.mxu0
      %666 = vrot.lane.b32.xlu0 %v236, 112
      %v667 = vpop.permute.xlu0 %666
      %668 = vrot.lane.b32.xlu0 %v236, 80
      %v669 = vpop.permute.xlu0 %668
      %v670 = vsel %vm247, %v667, 0
      %v672 = vsel %vm247, %v669, 0
      %674 = vmatprep.subr.mxu0 0.0
      %675 = vmatpush1.xpose.msra.mxu0 %v672
      %676 = vmatprep.subr.mxu0 0.0
      %677 = vmatpush1.xpose.msra.mxu0 0.0
      %678 = vmatprep.subr.mxu0 0.0
      %679 = vmatpush1.xpose.msra.mxu0 0.0
      %680 = vmatprep.subr.mxu0 0.0
      %681 = vmatpush1.xpose.msra.mxu0 0.0
      %682 = vmatprep.subr.mxu0 0.0
      %683 = vmatpush1.xpose.msra.mxu0 0.0
      %684 = vmatprep.subr.mxu0 0.0
      %685 = vmatpush1.xpose.msra.mxu0 0.0
      %686 = vmatprep.subr.mxu0 0.0
      %687 = vmatpush1.xpose.msra.mxu0 0.0
      %688 = vmatprep.subr.mxu0 0.0
      %689 = vmatpush1.xpose.msra.mxu0 0.0
      %690 = vmatprep.subr.mxu0 0.0
      %691 = vmatpush1.xpose.msra.mxu0 0.0
      %692 = vmatprep.subr.mxu0 0.0
      %693 = vmatpush1.xpose.msra.mxu0 0.0
      %694 = vmatprep.subr.mxu0 0.0
      %695 = vmatpush1.xpose.msra.mxu0 0.0
      %696 = vmatprep.subr.mxu0 0.0
      %697 = vmatpush1.xpose.msra.mxu0 0.0
      %698 = vmatprep.subr.mxu0 0.0
      %699 = vmatpush1.xpose.msra.mxu0 0.0
      %700 = vmatprep.subr.mxu0 0.0
      %701 = vmatpush1.xpose.msra.mxu0 0.0
      %702 = vmatprep.subr.mxu0 0.0
      %703 = vmatpush1.xpose.msra.mxu0 0.0
      %704 = vmatprep.subr.mxu0 0.0
      %705 = vmatpush1.xpose.msra.mxu0 0.0
      %706 = vmatprep.subr.mxu0 0.0
      %707 = vmatpush1.xpose.msra.mxu0 0.0
      %708 = vmatprep.subr.mxu0 0.0
      %709 = vmatpush1.xpose.msra.mxu0 0.0
      %710 = vmatprep.subr.mxu0 0.0
      %711 = vmatpush1.xpose.msra.mxu0 0.0
      %712 = vmatprep.subr.mxu0 0.0
      %713 = vmatpush1.xpose.msra.mxu0 0.0
      %714 = vmatprep.subr.mxu0 0.0
      %715 = vmatpush1.xpose.msra.mxu0 0.0
      %716 = vmatprep.subr.mxu0 0.0
      %717 = vmatpush1.xpose.msra.mxu0 0.0
      %718 = vmatprep.subr.mxu0 0.0
      %719 = vmatpush1.xpose.msra.mxu0 0.0
      %720 = vmatprep.subr.mxu0 0.0
      %721 = vmatpush1.xpose.msra.mxu0 0.0
      %722 = vmatprep.subr.mxu0 0.0
      %723 = vmatpush1.xpose.msra.mxu0 0.0
      %724 = vmatprep.subr.mxu0 0.0
      %725 = vmatpush1.xpose.msra.mxu0 0.0
      %726 = vmatprep.subr.mxu0 0.0
      %727 = vmatpush1.xpose.msra.mxu0 0.0
      %728 = vmatprep.subr.mxu0 0.0
      %729 = vmatpush1.xpose.msra.mxu0 0.0
      %730 = vmatprep.subr.mxu0 0.0
      %731 = vmatpush1.xpose.msra.mxu0 0.0
      %732 = vmatprep.subr.mxu0 0.0
      %733 = vmatpush1.xpose.msra.mxu0 0.0
      %734 = vmatprep.subr.mxu0 0.0
      %735 = vmatpush1.xpose.msra.mxu0 0.0
      %736 = vmatprep.subr.mxu0 0.0
      %737 = vmatpush1.xpose.msra.mxu0 0.0
      %738 = vmatprep.mubr.f32.mxu0 0.0
      %739 = vmatmul.mubr.f32.gmra.mrb[0].mxu0 %v670
      %v740 = vpop.f32.mrb[0].mxu0
      %v741 = vadd.f32 0.0, %v740
      %v742 = vpop.f32.mrb[0].mxu0
      %743 = vdwg.mxu0
      %v744 = vmul.f32 %v663, 0.25
      %v745 = vmul.f32 %v741, 0.25
      %v746 = vadd.f32 %v744, %v404
      %v747 = vadd.f32 %v745, %v408
      %v748 = vsel %vm413, %v746, -inf
      %749 = vmax.xlane.f32.xlu0 %v748
      %v750 = vpop.xlane.xlu0 %749
      %v751 = vsel %vm413, %v747, -inf
      %752 = vmax.xlane.f32.xlu0 %v751
      %v753 = vpop.xlane.xlu0 %752
      %v754 = vsub.f32 %v746, %v750
      %v755 = vsub.f32 %v747, %v753
      %v756 = vmul.f32 %v754, 1.442695
      %v757 = vpow.pop %v756
      %v758 = vmul.f32 %v755, 1.442695
      %v759 = vpow.pop %v758
      %v760 = vsel %vm413, %v757, 0.0
      %761 = vadd.xlane.f32.xlu0 %v760
      %v762 = vpop.xlane.xlu0 %761
      %v763 = vsel %vm413, %v759, 0.0
      %764 = vadd.xlane.f32.xlu0 %v763
      %v765 = vpop.xlane.xlu0 %764
      %v766 = vrcp.pop %v762
      %v767 = vrcp.pop %v765
      %v768 = vmul.f32 %v757, %v766
      %v769 = vmul.f32 %v759, %v767
      %770 = vrot.lane.b32.xlu0 %v231, 48
      %v771 = vpop.permute.xlu0 %770
      %v774 = vsel %vm413, %v768, 0
      %776 = vmatprep.subr.mxu0 0.0
      %777 = vmatpush1.msra.mxu0 %v771
      %778 = vmatprep.subr.mxu0 0.0
      %779 = vmatpush1.msra.mxu0 0.0
      %780 = vmatprep.subr.mxu0 0.0
      %781 = vmatpush1.msra.mxu0 0.0
      %782 = vmatprep.subr.mxu0 0.0
      %783 = vmatpush1.msra.mxu0 0.0
      %784 = vmatprep.subr.mxu0 0.0
      %785 = vmatpush1.msra.mxu0 0.0
      %786 = vmatprep.subr.mxu0 0.0
      %787 = vmatpush1.msra.mxu0 0.0
      %788 = vmatprep.subr.mxu0 0.0
      %789 = vmatpush1.msra.mxu0 0.0
      %790 = vmatprep.subr.mxu0 0.0
      %791 = vmatpush1.msra.mxu0 0.0
      %792 = vmatprep.subr.mxu0 0.0
      %793 = vmatpush1.msra.mxu0 0.0
      %794 = vmatprep.subr.mxu0 0.0
      %795 = vmatpush1.msra.mxu0 0.0
      %796 = vmatprep.subr.mxu0 0.0
      %797 = vmatpush1.msra.mxu0 0.0
      %798 = vmatprep.subr.mxu0 0.0
      %799 = vmatpush1.msra.mxu0 0.0
      %800 = vmatprep.subr.mxu0 0.0
      %801 = vmatpush1.msra.mxu0 0.0
      %802 = vmatprep.subr.mxu0 0.0
      %803 = vmatpush1.msra.mxu0 0.0
      %804 = vmatprep.subr.mxu0 0.0
      %805 = vmatpush1.msra.mxu0 0.0
      %806 = vmatprep.subr.mxu0 0.0
      %807 = vmatpush1.msra.mxu0 0.0
      %808 = vmatprep.subr.mxu0 0.0
      %809 = vmatpush1.msra.mxu0 0.0
      %810 = vmatprep.subr.mxu0 0.0
      %811 = vmatpush1.msra.mxu0 0.0
      %812 = vmatprep.subr.mxu0 0.0
      %813 = vmatpush1.msra.mxu0 0.0
      %814 = vmatprep.subr.mxu0 0.0
      %815 = vmatpush1.msra.mxu0 0.0
      %816 = vmatprep.subr.mxu0 0.0
      %817 = vmatpush1.msra.mxu0 0.0
      %818 = vmatprep.subr.mxu0 0.0
      %819 = vmatpush1.msra.mxu0 0.0
      %820 = vmatprep.subr.mxu0 0.0
      %821 = vmatpush1.msra.mxu0 0.0
      %822 = vmatprep.subr.mxu0 0.0
      %823 = vmatpush1.msra.mxu0 0.0
      %824 = vmatprep.subr.mxu0 0.0
      %825 = vmatpush1.msra.mxu0 0.0
      %826 = vmatprep.subr.mxu0 0.0
      %827 = vmatpush1.msra.mxu0 0.0
      %828 = vmatprep.subr.mxu0 0.0
      %829 = vmatpush1.msra.mxu0 0.0
      %830 = vmatprep.subr.mxu0 0.0
      %831 = vmatpush1.msra.mxu0 0.0
      %832 = vmatprep.subr.mxu0 0.0
      %833 = vmatpush1.msra.mxu0 0.0
      %834 = vmatprep.subr.mxu0 0.0
      %835 = vmatpush1.msra.mxu0 0.0
      %836 = vmatprep.subr.mxu0 0.0
      %837 = vmatpush1.msra.mxu0 0.0
      %838 = vmatprep.subr.mxu0 0.0
      %839 = vmatpush1.msra.mxu0 0.0
      %840 = vmatprep.mubr.f32.mxu0 0.0
      %841 = vmatmul.mubr.f32.gmra.mrb[0].mxu0 %v774
      %v842 = vpop.f32.mrb[0].mxu0
      %v843 = vadd.f32 0.0, %v842
      %v844 = vpop.f32.mrb[0].mxu0
      %845 = vdwg.mxu0
      %846 = vrot.lane.b32.xlu0 %v236, 48
      %v847 = vpop.permute.xlu0 %846
      %v850 = vsel %vm413, %v769, 0
      %852 = vmatprep.subr.mxu0 0.0
      %853 = vmatpush1.msra.mxu0 %v847
      %854 = vmatprep.subr.mxu0 0.0
      %855 = vmatpush1.msra.mxu0 0.0
      %856 = vmatprep.subr.mxu0 0.0
      %857 = vmatpush1.msra.mxu0 0.0
      %858 = vmatprep.subr.mxu0 0.0
      %859 = vmatpush1.msra.mxu0 0.0
      %860 = vmatprep.subr.mxu0 0.0
      %861 = vmatpush1.msra.mxu0 0.0
      %862 = vmatprep.subr.mxu0 0.0
      %863 = vmatpush1.msra.mxu0 0.0
      %864 = vmatprep.subr.mxu0 0.0
      %865 = vmatpush1.msra.mxu0 0.0
      %866 = vmatprep.subr.mxu0 0.0
      %867 = vmatpush1.msra.mxu0 0.0
      %868 = vmatprep.subr.mxu0 0.0
      %869 = vmatpush1.msra.mxu0 0.0
      %870 = vmatprep.subr.mxu0 0.0
      %871 = vmatpush1.msra.mxu0 0.0
      %872 = vmatprep.subr.mxu0 0.0
      %873 = vmatpush1.msra.mxu0 0.0
      %874 = vmatprep.subr.mxu0 0.0
      %875 = vmatpush1.msra.mxu0 0.0
      %876 = vmatprep.subr.mxu0 0.0
      %877 = vmatpush1.msra.mxu0 0.0
      %878 = vmatprep.subr.mxu0 0.0
      %879 = vmatpush1.msra.mxu0 0.0
      %880 = vmatprep.subr.mxu0 0.0
      %881 = vmatpush1.msra.mxu0 0.0
      %882 = vmatprep.subr.mxu0 0.0
      %883 = vmatpush1.msra.mxu0 0.0
      %884 = vmatprep.subr.mxu0 0.0
      %885 = vmatpush1.msra.mxu0 0.0
      %886 = vmatprep.subr.mxu0 0.0
      %887 = vmatpush1.msra.mxu0 0.0
      %888 = vmatprep.subr.mxu0 0.0
      %889 = vmatpush1.msra.mxu0 0.0
      %890 = vmatprep.subr.mxu0 0.0
      %891 = vmatpush1.msra.mxu0 0.0
      %892 = vmatprep.subr.mxu0 0.0
      %893 = vmatpush1.msra.mxu0 0.0
      %894 = vmatprep.subr.mxu0 0.0
      %895 = vmatpush1.msra.mxu0 0.0
      %896 = vmatprep.subr.mxu0 0.0
      %897 = vmatpush1.msra.mxu0 0.0
      %898 = vmatprep.subr.mxu0 0.0
      %899 = vmatpush1.msra.mxu0 0.0
      %900 = vmatprep.subr.mxu0 0.0
      %901 = vmatpush1.msra.mxu0 0.0
      %902 = vmatprep.subr.mxu0 0.0
      %903 = vmatpush1.msra.mxu0 0.0
      %904 = vmatprep.subr.mxu0 0.0
      %905 = vmatpush1.msra.mxu0 0.0
      %906 = vmatprep.subr.mxu0 0.0
      %907 = vmatpush1.msra.mxu0 0.0
      %908 = vmatprep.subr.mxu0 0.0
      %909 = vmatpush1.msra.mxu0 0.0
      %910 = vmatprep.subr.mxu0 0.0
      %911 = vmatpush1.msra.mxu0 0.0
      %912 = vmatprep.subr.mxu0 0.0
      %913 = vmatpush1.msra.mxu0 0.0
      %914 = vmatprep.subr.mxu0 0.0
      %915 = vmatpush1.msra.mxu0 0.0
      %916 = vmatprep.mubr.f32.mxu0 0.0
      %917 = vmatmul.mubr.f32.gmra.mrb[0].mxu0 %v850
      %v918 = vpop.f32.mrb[0].mxu0
      %v919 = vadd.f32 0.0, %v918
      %v920 = vpop.f32.mrb[0].mxu0
      %921 = vdwg.mxu0
      %v923 = vsel %vm247, %v843, 0
      %v926 = vsel %vm247, %v919, 0
      %928 = vmatprep.subr.mxu0 0.0
      %929 = vmatpush1.msra.mxu0 %v242
      %930 = vmatprep.subr.mxu0 0.0
      %931 = vmatpush1.msra.mxu0 %v243
      %932 = vmatprep.subr.mxu0 0.0
      %933 = vmatpush1.msra.mxu0 0.0
      %934 = vmatprep.subr.mxu0 0.0
      %935 = vmatpush1.msra.mxu0 0.0
      %936 = vmatprep.subr.mxu0 0.0
      %937 = vmatpush1.msra.mxu0 0.0
      %938 = vmatprep.subr.mxu0 0.0
      %939 = vmatpush1.msra.mxu0 0.0
      %940 = vmatprep.subr.mxu0 0.0
      %941 = vmatpush1.msra.mxu0 0.0
      %942 = vmatprep.subr.mxu0 0.0
      %943 = vmatpush1.msra.mxu0 0.0
      %944 = vmatprep.subr.mxu0 0.0
      %945 = vmatpush1.msra.mxu0 0.0
      %946 = vmatprep.subr.mxu0 0.0
      %947 = vmatpush1.msra.mxu0 0.0
      %948 = vmatprep.subr.mxu0 0.0
      %949 = vmatpush1.msra.mxu0 0.0
      %950 = vmatprep.subr.mxu0 0.0
      %951 = vmatpush1.msra.mxu0 0.0
      %952 = vmatprep.subr.mxu0 0.0
      %953 = vmatpush1.msra.mxu0 0.0
      %954 = vmatprep.subr.mxu0 0.0
      %955 = vmatpush1.msra.mxu0 0.0
      %956 = vmatprep.subr.mxu0 0.0
      %957 = vmatpush1.msra.mxu0 0.0
      %958 = vmatprep.subr.mxu0 0.0
      %959 = vmatpush1.msra.mxu0 0.0
      %960 = vmatprep.subr.mxu0 0.0
      %961 = vmatpush1.msra.mxu0 0.0
      %962 = vmatprep.subr.mxu0 0.0
      %963 = vmatpush1.msra.mxu0 0.0
      %964 = vmatprep.subr.mxu0 0.0
      %965 = vmatpush1.msra.mxu0 0.0
      %966 = vmatprep.subr.mxu0 0.0
      %967 = vmatpush1.msra.mxu0 0.0
      %968 = vmatprep.subr.mxu0 0.0
      %969 = vmatpush1.msra.mxu0 0.0
      %970 = vmatprep.subr.mxu0 0.0
      %971 = vmatpush1.msra.mxu0 0.0
      %972 = vmatprep.subr.mxu0 0.0
      %973 = vmatpush1.msra.mxu0 0.0
      %974 = vmatprep.subr.mxu0 0.0
      %975 = vmatpush1.msra.mxu0 0.0
      %976 = vmatprep.subr.mxu0 0.0
      %977 = vmatpush1.msra.mxu0 0.0
      %978 = vmatprep.subr.mxu0 0.0
      %979 = vmatpush1.msra.mxu0 0.0
      %980 = vmatprep.subr.mxu0 0.0
      %981 = vmatpush1.msra.mxu0 0.0
      %982 = vmatprep.subr.mxu0 0.0
      %983 = vmatpush1.msra.mxu0 0.0
      %984 = vmatprep.subr.mxu0 0.0
      %985 = vmatpush1.msra.mxu0 0.0
      %986 = vmatprep.subr.mxu0 0.0
      %987 = vmatpush1.msra.mxu0 0.0
      %988 = vmatprep.subr.mxu0 0.0
      %989 = vmatpush1.msra.mxu0 0.0
      %990 = vmatprep.subr.mxu0 0.0
      %991 = vmatpush1.msra.mxu0 0.0
      %992 = vmatprep.mubr.f32.mxu0 0.0
      %993 = vmatmul.mubr.f32.gmra.mrb[0].mxu0 %v923
      %v994 = vpop.f32.mrb[0].mxu0
      %v995 = vadd.f32 0.0, %v994
      %v996 = vpop.f32.mrb[0].mxu0
      %997 = vmatprep.mubr.f32.mxu0 0.0
      %998 = vmatmul.mubr.f32.gmra.mrb[0].mxu0 %v926
      %v999 = vpop.f32.mrb[0].mxu0
      %v1000 = vadd.f32 0.0, %v999
      %v1001 = vpop.f32.mrb[0].mxu0
      %1002 = vdwg.mxu0
      %v1004 = vsel %vm247, %v509, 0
      %v1007 = vsel %vm247, %v585, 0
      %1009 = vmatprep.subr.mxu0 0.0
      %1010 = vmatpush1.msra.mxu0 %v240
      %1011 = vmatprep.subr.mxu0 0.0
      %1012 = vmatpush1.msra.mxu0 %v241
      %1013 = vmatprep.subr.mxu0 0.0
      %1014 = vmatpush1.msra.mxu0 0.0
      %1015 = vmatprep.subr.mxu0 0.0
      %1016 = vmatpush1.msra.mxu0 0.0
      %1017 = vmatprep.subr.mxu0 0.0
      %1018 = vmatpush1.msra.mxu0 0.0
      %1019 = vmatprep.subr.mxu0 0.0
      %1020 = vmatpush1.msra.mxu0 0.0
      %1021 = vmatprep.subr.mxu0 0.0
      %1022 = vmatpush1.msra.mxu0 0.0
      %1023 = vmatprep.subr.mxu0 0.0
      %1024 = vmatpush1.msra.mxu0 0.0
      %1025 = vmatprep.subr.mxu0 0.0
      %1026 = vmatpush1.msra.mxu0 0.0
      %1027 = vmatprep.subr.mxu0 0.0
      %1028 = vmatpush1.msra.mxu0 0.0
      %1029 = vmatprep.subr.mxu0 0.0
      %1030 = vmatpush1.msra.mxu0 0.0
      %1031 = vmatprep.subr.mxu0 0.0
      %1032 = vmatpush1.msra.mxu0 0.0
      %1033 = vmatprep.subr.mxu0 0.0
      %1034 = vmatpush1.msra.mxu0 0.0
      %1035 = vmatprep.subr.mxu0 0.0
      %1036 = vmatpush1.msra.mxu0 0.0
      %1037 = vmatprep.subr.mxu0 0.0
      %1038 = vmatpush1.msra.mxu0 0.0
      %1039 = vmatprep.subr.mxu0 0.0
      %1040 = vmatpush1.msra.mxu0 0.0
      %1041 = vmatprep.subr.mxu0 0.0
      %1042 = vmatpush1.msra.mxu0 0.0
      %1043 = vmatprep.subr.mxu0 0.0
      %1044 = vmatpush1.msra.mxu0 0.0
      %1045 = vmatprep.subr.mxu0 0.0
      %1046 = vmatpush1.msra.mxu0 0.0
      %1047 = vmatprep.subr.mxu0 0.0
      %1048 = vmatpush1.msra.mxu0 0.0
      %1049 = vmatprep.subr.mxu0 0.0
      %1050 = vmatpush1.msra.mxu0 0.0
      %1051 = vmatprep.subr.mxu0 0.0
      %1052 = vmatpush1.msra.mxu0 0.0
      %1053 = vmatprep.subr.mxu0 0.0
      %1054 = vmatpush1.msra.mxu0 0.0
      %1055 = vmatprep.subr.mxu0 0.0
      %1056 = vmatpush1.msra.mxu0 0.0
      %1057 = vmatprep.subr.mxu0 0.0
      %1058 = vmatpush1.msra.mxu0 0.0
      %1059 = vmatprep.subr.mxu0 0.0
      %1060 = vmatpush1.msra.mxu0 0.0
      %1061 = vmatprep.subr.mxu0 0.0
      %1062 = vmatpush1.msra.mxu0 0.0
      %1063 = vmatprep.subr.mxu0 0.0
      %1064 = vmatpush1.msra.mxu0 0.0
      %1065 = vmatprep.subr.mxu0 0.0
      %1066 = vmatpush1.msra.mxu0 0.0
      %1067 = vmatprep.subr.mxu0 0.0
      %1068 = vmatpush1.msra.mxu0 0.0
      %1069 = vmatprep.subr.mxu0 0.0
      %1070 = vmatpush1.msra.mxu0 0.0
      %1071 = vmatprep.subr.mxu0 0.0
      %1072 = vmatpush1.msra.mxu0 0.0
      %1073 = vmatprep.mubr.f32.mxu0 0.0
      %1074 = vmatmul.mubr.f32.gmra.mrb[0].mxu0 %v1004
      %v1075 = vpop.f32.mrb[0].mxu0
      %v1076 = vadd.f32 %v995, %v1075
      %v1077 = vpop.f32.mrb[0].mxu0
      %1078 = vmatprep.mubr.f32.mxu0 0.0
      %1079 = vmatmul.mubr.f32.gmra.mrb[0].mxu0 %v1007
      %v1080 = vpop.f32.mrb[0].mxu0
      %v1081 = vadd.f32 %v1000, %v1080
      %v1082 = vpop.f32.mrb[0].mxu0
      %1083 = vdwg.mxu0
      %s1084 = scalar_lea.vmem %s7, %s137
      %v1085 = vld [vmem:[%s1084] sm:$0x1]
      %v1087 = vlaneseq
      %v1088 = vshrl.u32 %v1087, 7
      %v1089 = vsub.s32 0, %v1088
      %v1090 = vrot.slane %v1085, %v1089
      %v1092 = vadd.f32 %v1076, %v1090
      %v1093 = vadd.f32 %v1081, %v1090
      %v1094 = vadd.f32 %v142, %v1092
      %v1095 = vadd.f32 %v143, %v1093
      %s1096 = scalar_lea.vmem %s8, %s137
      %v1097 = vld [vmem:[%s1096] sm:$0x1]
      %s1098 = scalar_lea.vmem %s9, %s137
      %v1099 = vld [vmem:[%s1098] sm:$0x1]
      %v1100 = vsel %vm64, %v1094, 0.0
      %1101 = vadd.xlane.f32.xlu0 %v1100
      %v1102 = vpop.xlane.xlu0 %1101
      %v1103 = vsel %vm64, %v1095, 0.0
      %1104 = vadd.xlane.f32.xlu0 %v1103
      %v1105 = vpop.xlane.xlu0 %1104
      %v1106 = vmul.f32 %v1102, %v71
      %v1107 = vmul.f32 %v1105, %v71
      %v1108 = vsub.f32 %v1094, %v1106
      %v1109 = vsub.f32 %v1095, %v1107
      %v1110 = vmul.f32 %v1108, %v1108
      %v1111 = vmul.f32 %v1109, %v1109
      %v1112 = vsel %vm64, %v1110, 0.0
      %1113 = vadd.xlane.f32.xlu0 %v1112
      %v1114 = vpop.xlane.xlu0 %1113
      %v1115 = vsel %vm64, %v1111, 0.0
      %1116 = vadd.xlane.f32.xlu0 %v1115
      %v1117 = vpop.xlane.xlu0 %1116
      %v1118 = vmul.f32 %v1114, %v71
      %v1119 = vmul.f32 %v1117, %v71
      %v1120 = vadd.f32 %v1118, 1e-12
      %v1121 = vadd.f32 %v1119, 1e-12
      %v1122 = vrsqrt.pop %v1120
      %v1123 = vrsqrt.pop %v1121
      %v1124 = vmul.f32 %v1108, %v1122
      %v1125 = vmul.f32 %v1109, %v1123
      %v1127 = vlaneseq
      %v1128 = vshrl.u32 %v1127, 7
      %v1129 = vsub.s32 0, %v1128
      %v1130 = vrot.slane %v1097, %v1129
      %v1132 = vmul.f32 %v1124, %v1130
      %v1133 = vmul.f32 %v1125, %v1130
      %v1135 = vlaneseq
      %v1136 = vshrl.u32 %v1135, 7
      %v1137 = vsub.s32 0, %v1136
      %v1138 = vrot.slane %v1099, %v1137
      %v1140 = vadd.f32 %v1132, %v1138
      %v1141 = vadd.f32 %v1133, %v1138
      %s1142 = scalar_lea.vmem %s10, %s144
      %v1143 = vld [vmem:[%s1142] sm:$0xff]
      %v1144 = vld [vmem:[%s1142 + $0x8] sm:$0xff]
      %v1145 = vld [vmem:[%s1142 + $0x10] sm:$0xff]
      %v1146 = vld [vmem:[%s1142 + $0x18] sm:$0xff]
      %s1147 = scalar_lea.vmem %s11, %s137
      %v1148 = vld [vmem:[%s1147] sm:$0x1]
      %v1150 = vlaneseq
      %v1151 = vshrl.u32 %v1150, 7
      %v1152 = vsub.s32 0, %v1151
      %v1153 = vrot.slane %v1148, %v1152
      %v1156 = vsel %vm64, %v1140, 0
      %v1159 = vsel %vm64, %v1141, 0
      %1161 = vmatprep.subr.mxu0 0.0
      %1162 = vmatpush1.msra.mxu0 %v1143
      %1163 = vmatprep.subr.mxu0 0.0
      %1164 = vmatpush1.msra.mxu0 %v1144
      %1165 = vmatprep.subr.mxu0 0.0
      %1166 = vmatpush1.msra.mxu0 %v1145
      %1167 = vmatprep.subr.mxu0 0.0
      %1168 = vmatpush1.msra.mxu0 %v1146
      %1169 = vmatprep.subr.mxu0 0.0
      %1170 = vmatpush1.msra.mxu0 0.0
      %1171 = vmatprep.subr.mxu0 0.0
      %1172 = vmatpush1.msra.mxu0 0.0
      %1173 = vmatprep.subr.mxu0 0.0
      %1174 = vmatpush1.msra.mxu0 0.0
      %1175 = vmatprep.subr.mxu0 0.0
      %1176 = vmatpush1.msra.mxu0 0.0
      %1177 = vmatprep.subr.mxu0 0.0
      %1178 = vmatpush1.msra.mxu0 0.0
      %1179 = vmatprep.subr.mxu0 0.0
      %1180 = vmatpush1.msra.mxu0 0.0
      %1181 = vmatprep.subr.mxu0 0.0
      %1182 = vmatpush1.msra.mxu0 0.0
      %1183 = vmatprep.subr.mxu0 0.0
      %1184 = vmatpush1.msra.mxu0 0.0
      %1185 = vmatprep.subr.mxu0 0.0
      %1186 = vmatpush1.msra.mxu0 0.0
      %1187 = vmatprep.subr.mxu0 0.0
      %1188 = vmatpush1.msra.mxu0 0.0
      %1189 = vmatprep.subr.mxu0 0.0
      %1190 = vmatpush1.msra.mxu0 0.0
      %1191 = vmatprep.subr.mxu0 0.0
      %1192 = vmatpush1.msra.mxu0 0.0
      %1193 = vmatprep.subr.mxu0 0.0
      %1194 = vmatpush1.msra.mxu0 0.0
      %1195 = vmatprep.subr.mxu0 0.0
      %1196 = vmatpush1.msra.mxu0 0.0
      %1197 = vmatprep.subr.mxu0 0.0
      %1198 = vmatpush1.msra.mxu0 0.0
      %1199 = vmatprep.subr.mxu0 0.0
      %1200 = vmatpush1.msra.mxu0 0.0
      %1201 = vmatprep.subr.mxu0 0.0
      %1202 = vmatpush1.msra.mxu0 0.0
      %1203 = vmatprep.subr.mxu0 0.0
      %1204 = vmatpush1.msra.mxu0 0.0
      %1205 = vmatprep.subr.mxu0 0.0
      %1206 = vmatpush1.msra.mxu0 0.0
      %1207 = vmatprep.subr.mxu0 0.0
      %1208 = vmatpush1.msra.mxu0 0.0
      %1209 = vmatprep.subr.mxu0 0.0
      %1210 = vmatpush1.msra.mxu0 0.0
      %1211 = vmatprep.subr.mxu0 0.0
      %1212 = vmatpush1.msra.mxu0 0.0
      %1213 = vmatprep.subr.mxu0 0.0
      %1214 = vmatpush1.msra.mxu0 0.0
      %1215 = vmatprep.subr.mxu0 0.0
      %1216 = vmatpush1.msra.mxu0 0.0
      %1217 = vmatprep.subr.mxu0 0.0
      %1218 = vmatpush1.msra.mxu0 0.0
      %1219 = vmatprep.subr.mxu0 0.0
      %1220 = vmatpush1.msra.mxu0 0.0
      %1221 = vmatprep.subr.mxu0 0.0
      %1222 = vmatpush1.msra.mxu0 0.0
      %1223 = vmatprep.subr.mxu0 0.0
      %1224 = vmatpush1.msra.mxu0 0.0
      %1225 = vmatprep.mubr.f32.mxu0 0.0
      %1226 = vmatmul.mubr.f32.gmra.mrb[0].mxu0 %v1156
      %v1227 = vpop.f32.mrb[0].mxu0
      %v1228 = vadd.f32 %v1153, %v1227
      %v1229 = vpop.f32.mrb[0].mxu0
      %1230 = vmatprep.mubr.f32.mxu0 0.0
      %1231 = vmatmul.mubr.f32.gmra.mrb[0].mxu0 %v1159
      %v1232 = vpop.f32.mrb[0].mxu0
      %v1233 = vadd.f32 %v1153, %v1232
      %v1234 = vpop.f32.mrb[0].mxu0
      %1235 = vdwg.mxu0
      %v1236 = vmul.f32 %v1228, %v1228
      %v1237 = vmul.f32 %v1233, %v1233
      %v1238 = vmul.f32 %v1228, %v1236
      %v1239 = vmul.f32 %v1233, %v1237
      %v1240 = vmul.f32 %v1238, 0.044715
      %v1241 = vmul.f32 %v1239, 0.044715
      %v1242 = vadd.f32 %v1228, %v1240
      %v1243 = vadd.f32 %v1233, %v1241
      %v1244 = vmul.f32 %v1242, 0.7978846
      %v1245 = vmul.f32 %v1243, 0.7978846
      %v1246 = vtanh.pop %v1244
      %v1247 = vtanh.pop %v1245
      %v1248 = vadd.f32 %v1246, 1.0
      %v1249 = vadd.f32 %v1247, 1.0
      %v1250 = vmul.f32 %v1248, 0.5
      %v1251 = vmul.f32 %v1249, 0.5
      %v1252 = vmul.f32 %v1228, %v1250
      %v1253 = vmul.f32 %v1233, %v1251
      %s1254 = smul.u32 %s137, 64
      %s1255 = scalar_lea.vmem %s12, %s1254
      %v1256 = vld [vmem:[%s1255] sm:$0xff]
      %v1257 = vld [vmem:[%s1255 + $0x8] sm:$0xff]
      %v1258 = vld [vmem:[%s1255 + $0x10] sm:$0xff]
      %v1259 = vld [vmem:[%s1255 + $0x18] sm:$0xff]
      %v1260 = vld [vmem:[%s1255 + $0x20] sm:$0xff]
      %v1261 = vld [vmem:[%s1255 + $0x28] sm:$0xff]
      %v1262 = vld [vmem:[%s1255 + $0x30] sm:$0xff]
      %v1263 = vld [vmem:[%s1255 + $0x38] sm:$0xff]
      %s1264 = scalar_lea.vmem %s13, %s137
      %v1265 = vld [vmem:[%s1264] sm:$0x1]
      %v1267 = vlaneseq
      %v1268 = vshrl.u32 %v1267, 7
      %v1269 = vsub.s32 0, %v1268
      %v1270 = vrot.slane %v1265, %v1269
      %vm1272 = vcmask 523264
      %v1274 = vsel %vm1272, %v1252, 0
      %v1277 = vsel %vm1272, %v1253, 0
      %1279 = vmatprep.subr.mxu0 0.0
      %1280 = vmatpush1.msra.mxu0 %v1256
      %1281 = vmatprep.subr.mxu0 0.0
      %1282 = vmatpush1.msra.mxu0 %v1257
      %1283 = vmatprep.subr.mxu0 0.0
      %1284 = vmatpush1.msra.mxu0 %v1258
      %1285 = vmatprep.subr.mxu0 0.0
      %1286 = vmatpush1.msra.mxu0 %v1259
      %1287 = vmatprep.subr.mxu0 0.0
      %1288 = vmatpush1.msra.mxu0 %v1260
      %1289 = vmatprep.subr.mxu0 0.0
      %1290 = vmatpush1.msra.mxu0 %v1261
      %1291 = vmatprep.subr.mxu0 0.0
      %1292 = vmatpush1.msra.mxu0 %v1262
      %1293 = vmatprep.subr.mxu0 0.0
      %1294 = vmatpush1.msra.mxu0 %v1263
      %1295 = vmatprep.subr.mxu0 0.0
      %1296 = vmatpush1.msra.mxu0 0.0
      %1297 = vmatprep.subr.mxu0 0.0
      %1298 = vmatpush1.msra.mxu0 0.0
      %1299 = vmatprep.subr.mxu0 0.0
      %1300 = vmatpush1.msra.mxu0 0.0
      %1301 = vmatprep.subr.mxu0 0.0
      %1302 = vmatpush1.msra.mxu0 0.0
      %1303 = vmatprep.subr.mxu0 0.0
      %1304 = vmatpush1.msra.mxu0 0.0
      %1305 = vmatprep.subr.mxu0 0.0
      %1306 = vmatpush1.msra.mxu0 0.0
      %1307 = vmatprep.subr.mxu0 0.0
      %1308 = vmatpush1.msra.mxu0 0.0
      %1309 = vmatprep.subr.mxu0 0.0
      %1310 = vmatpush1.msra.mxu0 0.0
      %1311 = vmatprep.subr.mxu0 0.0
      %1312 = vmatpush1.msra.mxu0 0.0
      %1313 = vmatprep.subr.mxu0 0.0
      %1314 = vmatpush1.msra.mxu0 0.0
      %1315 = vmatprep.subr.mxu0 0.0
      %1316 = vmatpush1.msra.mxu0 0.0
      %1317 = vmatprep.subr.mxu0 0.0
      %1318 = vmatpush1.msra.mxu0 0.0
      %1319 = vmatprep.subr.mxu0 0.0
      %1320 = vmatpush1.msra.mxu0 0.0
      %1321 = vmatprep.subr.mxu0 0.0
      %1322 = vmatpush1.msra.mxu0 0.0
      %1323 = vmatprep.subr.mxu0 0.0
      %1324 = vmatpush1.msra.mxu0 0.0
      %1325 = vmatprep.subr.mxu0 0.0
      %1326 = vmatpush1.msra.mxu0 0.0
      %1327 = vmatprep.subr.mxu0 0.0
      %1328 = vmatpush1.msra.mxu0 0.0
      %1329 = vmatprep.subr.mxu0 0.0
      %1330 = vmatpush1.msra.mxu0 0.0
      %1331 = vmatprep.subr.mxu0 0.0
      %1332 = vmatpush1.msra.mxu0 0.0
      %1333 = vmatprep.subr.mxu0 0.0
      %1334 = vmatpush1.msra.mxu0 0.0
      %1335 = vmatprep.subr.mxu0 0.0
      %1336 = vmatpush1.msra.mxu0 0.0
      %1337 = vmatprep.subr.mxu0 0.0
      %1338 = vmatpush1.msra.mxu0 0.0
      %1339 = vmatprep.subr.mxu0 0.0
      %1340 = vmatpush1.msra.mxu0 0.0
      %1341 = vmatprep.subr.mxu0 0.0
      %1342 = vmatpush1.msra.mxu0 0.0
      %1343 = vmatprep.mubr.f32.mxu0 0.0
      %1344 = vmatmul.mubr.f32.gmra.mrb[0].mxu0 %v1274
      %v1345 = vpop.f32.mrb[0].mxu0
      %v1346 = vadd.f32 %v1270, %v1345
      %v1347 = vpop.f32.mrb[0].mxu0
      %1348 = vmatprep.mubr.f32.mxu0 0.0
      %1349 = vmatmul.mubr.f32.gmra.mrb[0].mxu0 %v1277
      %v1350 = vpop.f32.mrb[0].mxu0
      %v1351 = vadd.f32 %v1270, %v1350
      %v1352 = vpop.f32.mrb[0].mxu0
      %1353 = vdwg.mxu0
      %v1354 = vadd.f32 %v1140, %v1346
      %v1355 = vadd.f32 %v1141, %v1351
      %s1356 = scalar_lea.vmem %s14, %s137
      %v1357 = vld [vmem:[%s1356] sm:$0x1]
      %s1358 = scalar_lea.vmem %s15, %s137
      %v1359 = vld [vmem:[%s1358] sm:$0x1]
      %v1360 = vsel %vm64, %v1354, 0.0
      %1361 = vadd.xlane.f32.xlu0 %v1360
      %v1362 = vpop.xlane.xlu0 %1361
      %v1363 = vsel %vm64, %v1355, 0.0
      %1364 = vadd.xlane.f32.xlu0 %v1363
      %v1365 = vpop.xlane.xlu0 %1364
      %v1366 = vmul.f32 %v1362, %v71
      %v1367 = vmul.f32 %v1365, %v71
      %v1368 = vsub.f32 %v1354, %v1366
      %v1369 = vsub.f32 %v1355, %v1367
      %v1370 = vmul.f32 %v1368, %v1368
      %v1371 = vmul.f32 %v1369, %v1369
      %v1372 = vsel %vm64, %v1370, 0.0
      %1373 = vadd.xlane.f32.xlu0 %v1372
      %v1374 = vpop.xlane.xlu0 %1373
      %v1375 = vsel %vm64, %v1371, 0.0
      %1376 = vadd.xlane.f32.xlu0 %v1375
      %v1377 = vpop.xlane.xlu0 %1376
      %v1378 = vmul.f32 %v1374, %v71
      %v1379 = vmul.f32 %v1377, %v71
      %v1380 = vadd.f32 %v1378, 1e-12
      %v1381 = vadd.f32 %v1379, 1e-12
      %v1382 = vrsqrt.pop %v1380
      %v1383 = vrsqrt.pop %v1381
      %v1384 = vmul.f32 %v1368, %v1382
      %v1385 = vmul.f32 %v1369, %v1383
      %v1387 = vlaneseq
      %v1388 = vshrl.u32 %v1387, 7
      %v1389 = vsub.s32 0, %v1388
      %v1390 = vrot.slane %v1357, %v1389
      %v1392 = vmul.f32 %v1384, %v1390
      %v1393 = vmul.f32 %v1385, %v1390
      %v1395 = vlaneseq
      %v1396 = vshrl.u32 %v1395, 7
      %v1397 = vsub.s32 0, %v1396
      %v1398 = vrot.slane %v1359, %v1397
      %v1400 = vadd.f32 %v1392, %v1398
      %v1401 = vadd.f32 %v1393, %v1398
      %1402 = vst.msk [vmem:[#allocation2] sm:$0xff] %vm64, %v1400
      %1403 = vst.msk [vmem:[#allocation2 + $0x8] sm:$0xff] %vm64, %v1401
    $region78: #{hf_text_encoder_forward.1} parent=1 // loop_footer
      %s141 = sadd.s32 1, %s137
    $region79: #{hf_text_encoder_forward.1} parent=1 // loop_footer_branch
      %136 = sbr.rel target = $region75
    $region80: #{hf_text_encoder_forward.1} parent=1 // loop_exit
      _
    %v1404 = vld [vmem:[#allocation2] sm:$0xff]
    %v1405 = vld [vmem:[#allocation2 + $0x8] sm:$0xff]
    %v1406 = vlaneseq
    %v1407 = vshrl.u32 %v1406, 7
    %v1408 = vsub.s32 0, %v1407
    %v1409 = vrot.slane %v110, %v1408
    %1411 = vbcast.lane.b32.xlu0 %v1409, 256
    %v1412 = vpop.permute.xlu0 %1411
    %v1413 = vlaneseq
    %v1414 = vshrl.u32 %v1413, 7
    %v1415 = vsub.s32 1, %v1414
    %v1416 = vrot.slane %v110, %v1415
    %1418 = vbcast.lane.b32.xlu0 %v1416, 256
    %v1419 = vpop.permute.xlu0 %1418
    %v1420 = vmul.f32 %v1404, %v1412
    %v1421 = vmul.f32 %v1405, %v1419
    %v1422 = vsel %vm64, %v1420, 0.0
    %v1423 = vrot.slane %v1422, 4
    %v1424 = vadd.f32 %v1422, %v1423
    %v1425 = vrot.slane %v1424, 2
    %v1426 = vadd.f32 %v1424, %v1425
    %v1427 = vrot.slane %v1426, 1
    %v1428 = vadd.f32 %v1426, %v1427
    %v1429 = vsel %vm64, %v1421, 0.0
    %v1430 = vrot.slane %v1429, 4
    %v1431 = vadd.f32 %v1429, %v1430
    %v1432 = vrot.slane %v1431, 2
    %v1433 = vadd.f32 %v1431, %v1432
    %v1434 = vrot.slane %v1433, 1
    %v1435 = vadd.f32 %v1433, %v1434
    %vm1436 = vcmask 58368
    %v1437 = vsel %vm1436, %v110, 0.0
    %1438 = vadd.xlane.f32.xlu0 %v1437
    %v1439 = vpop.xlane.xlu0 %1438
    %v1440 = vmax.f32 %v1439, 1.0
    %v1441 = vrcp.pop %v1440
    %v1443 = vrot.slane %v1441, 1
    %v1446 = vmul.f32 %v1428, %v1441
    %v1447 = vmul.f32 %v1435, %v1443
    %v1448 = vld [vmem:[%s16] sm:$0xff]
    %v1449 = vld [vmem:[%s16 + $0x8] sm:$0xff]
    %v1450 = vld [vmem:[%s16 + $0x10] sm:$0xff]
    %v1451 = vld [vmem:[%s16 + $0x18] sm:$0xff]
    %v1454 = vrot.slane %v1447, 7
    %vm1455 = vcmask 1041409
    %v1456 = vsel %vm1455, %v1454, %v1446
    %v1457 = vsel %vm64, %v1456, 0
    %1459 = vmatprep.subr.mxu0 0.0
    %1460 = vmatpush1.msra.mxu0 %v1448
    %1461 = vmatprep.subr.mxu0 0.0
    %1462 = vmatpush1.msra.mxu0 %v1449
    %1463 = vmatprep.subr.mxu0 0.0
    %1464 = vmatpush1.msra.mxu0 %v1450
    %1465 = vmatprep.subr.mxu0 0.0
    %1466 = vmatpush1.msra.mxu0 %v1451
    %1467 = vmatprep.subr.mxu0 0.0
    %1468 = vmatpush1.msra.mxu0 0.0
    %1469 = vmatprep.subr.mxu0 0.0
    %1470 = vmatpush1.msra.mxu0 0.0
    %1471 = vmatprep.subr.mxu0 0.0
    %1472 = vmatpush1.msra.mxu0 0.0
    %1473 = vmatprep.subr.mxu0 0.0
    %1474 = vmatpush1.msra.mxu0 0.0
    %1475 = vmatprep.subr.mxu0 0.0
    %1476 = vmatpush1.msra.mxu0 0.0
    %1477 = vmatprep.subr.mxu0 0.0
    %1478 = vmatpush1.msra.mxu0 0.0
    %1479 = vmatprep.subr.mxu0 0.0
    %1480 = vmatpush1.msra.mxu0 0.0
    %1481 = vmatprep.subr.mxu0 0.0
    %1482 = vmatpush1.msra.mxu0 0.0
    %1483 = vmatprep.subr.mxu0 0.0
    %1484 = vmatpush1.msra.mxu0 0.0
    %1485 = vmatprep.subr.mxu0 0.0
    %1486 = vmatpush1.msra.mxu0 0.0
    %1487 = vmatprep.subr.mxu0 0.0
    %1488 = vmatpush1.msra.mxu0 0.0
    %1489 = vmatprep.subr.mxu0 0.0
    %1490 = vmatpush1.msra.mxu0 0.0
    %1491 = vmatprep.subr.mxu0 0.0
    %1492 = vmatpush1.msra.mxu0 0.0
    %1493 = vmatprep.subr.mxu0 0.0
    %1494 = vmatpush1.msra.mxu0 0.0
    %1495 = vmatprep.subr.mxu0 0.0
    %1496 = vmatpush1.msra.mxu0 0.0
    %1497 = vmatprep.subr.mxu0 0.0
    %1498 = vmatpush1.msra.mxu0 0.0
    %1499 = vmatprep.subr.mxu0 0.0
    %1500 = vmatpush1.msra.mxu0 0.0
    %1501 = vmatprep.subr.mxu0 0.0
    %1502 = vmatpush1.msra.mxu0 0.0
    %1503 = vmatprep.subr.mxu0 0.0
    %1504 = vmatpush1.msra.mxu0 0.0
    %1505 = vmatprep.subr.mxu0 0.0
    %1506 = vmatpush1.msra.mxu0 0.0
    %1507 = vmatprep.subr.mxu0 0.0
    %1508 = vmatpush1.msra.mxu0 0.0
    %1509 = vmatprep.subr.mxu0 0.0
    %1510 = vmatpush1.msra.mxu0 0.0
    %1511 = vmatprep.subr.mxu0 0.0
    %1512 = vmatpush1.msra.mxu0 0.0
    %1513 = vmatprep.subr.mxu0 0.0
    %1514 = vmatpush1.msra.mxu0 0.0
    %1515 = vmatprep.subr.mxu0 0.0
    %1516 = vmatpush1.msra.mxu0 0.0
    %1517 = vmatprep.subr.mxu0 0.0
    %1518 = vmatpush1.msra.mxu0 0.0
    %1519 = vmatprep.subr.mxu0 0.0
    %1520 = vmatpush1.msra.mxu0 0.0
    %1521 = vmatprep.subr.mxu0 0.0
    %1522 = vmatpush1.msra.mxu0 0.0
    %1523 = vmatprep.mubr.f32.mxu0 0.0
    %1524 = vmatmul.mubr.f32.gmra.mrb[0].mxu0 %v1457
    %v1525 = vpop.f32.mrb[0].mxu0
    %v1526 = vadd.f32 0.0, %v1525
    %v1527 = vpop.f32.mrb[0].mxu0
    %1528 = vdwg.mxu0
    %v1529 = vmul.f32 %v1526, %v1526
    %v1530 = vmul.f32 %v1526, %v1529
    %v1531 = vmul.f32 %v1530, 0.044715
    %v1532 = vadd.f32 %v1526, %v1531
    %v1533 = vmul.f32 %v1532, 0.7978846
    %v1534 = vtanh.pop %v1533
    %v1535 = vadd.f32 %v1534, 1.0
    %v1536 = vmul.f32 %v1535, 0.5
    %v1537 = vmul.f32 %v1526, %v1536
    %v1538 = vld [vmem:[%s17] sm:$0xff]
    %v1539 = vld [vmem:[%s17 + $0x8] sm:$0xff]
    %v1540 = vld [vmem:[%s17 + $0x10] sm:$0xff]
    %vm1541 = vcmask 195584
    %v1543 = vsel %vm1541, %v1537, 0
    %1545 = vmatprep.subr.mxu0 0.0
    %1546 = vmatpush1.msra.mxu0 %v1538
    %1547 = vmatprep.subr.mxu0 0.0
    %1548 = vmatpush1.msra.mxu0 %v1539
    %1549 = vmatprep.subr.mxu0 0.0
    %1550 = vmatpush1.msra.mxu0 %v1540
    %1551 = vmatprep.subr.mxu0 0.0
    %1552 = vmatpush1.msra.mxu0 0.0
    %1553 = vmatprep.subr.mxu0 0.0
    %1554 = vmatpush1.msra.mxu0 0.0
    %1555 = vmatprep.subr.mxu0 0.0
    %1556 = vmatpush1.msra.mxu0 0.0
    %1557 = vmatprep.subr.mxu0 0.0
    %1558 = vmatpush1.msra.mxu0 0.0
    %1559 = vmatprep.subr.mxu0 0.0
    %1560 = vmatpush1.msra.mxu0 0.0
    %1561 = vmatprep.subr.mxu0 0.0
    %1562 = vmatpush1.msra.mxu0 0.0
    %1563 = vmatprep.subr.mxu0 0.0
    %1564 = vmatpush1.msra.mxu0 0.0
    %1565 = vmatprep.subr.mxu0 0.0
    %1566 = vmatpush1.msra.mxu0 0.0
    %1567 = vmatprep.subr.mxu0 0.0
    %1568 = vmatpush1.msra.mxu0 0.0
    %1569 = vmatprep.subr.mxu0 0.0
    %1570 = vmatpush1.msra.mxu0 0.0
    %1571 = vmatprep.subr.mxu0 0.0
    %1572 = vmatpush1.msra.mxu0 0.0
    %1573 = vmatprep.subr.mxu0 0.0
    %1574 = vmatpush1.msra.mxu0 0.0
    %1575 = vmatprep.subr.mxu0 0.0
    %1576 = vmatpush1.msra.mxu0 0.0
    %1577 = vmatprep.subr.mxu0 0.0
    %1578 = vmatpush1.msra.mxu0 0.0
    %1579 = vmatprep.subr.mxu0 0.0
    %1580 = vmatpush1.msra.mxu0 0.0
    %1581 = vmatprep.subr.mxu0 0.0
    %1582 = vmatpush1.msra.mxu0 0.0
    %1583 = vmatprep.subr.mxu0 0.0
    %1584 = vmatpush1.msra.mxu0 0.0
    %1585 = vmatprep.subr.mxu0 0.0
    %1586 = vmatpush1.msra.mxu0 0.0
    %1587 = vmatprep.subr.mxu0 0.0
    %1588 = vmatpush1.msra.mxu0 0.0
    %1589 = vmatprep.subr.mxu0 0.0
    %1590 = vmatpush1.msra.mxu0 0.0
    %1591 = vmatprep.subr.mxu0 0.0
    %1592 = vmatpush1.msra.mxu0 0.0
    %1593 = vmatprep.subr.mxu0 0.0
    %1594 = vmatpush1.msra.mxu0 0.0
    %1595 = vmatprep.subr.mxu0 0.0
    %1596 = vmatpush1.msra.mxu0 0.0
    %1597 = vmatprep.subr.mxu0 0.0
    %1598 = vmatpush1.msra.mxu0 0.0
    %1599 = vmatprep.subr.mxu0 0.0
    %1600 = vmatpush1.msra.mxu0 0.0
    %1601 = vmatprep.subr.mxu0 0.0
    %1602 = vmatpush1.msra.mxu0 0.0
    %1603 = vmatprep.subr.mxu0 0.0
    %1604 = vmatpush1.msra.mxu0 0.0
    %1605 = vmatprep.subr.mxu0 0.0
    %1606 = vmatpush1.msra.mxu0 0.0
    %1607 = vmatprep.subr.mxu0 0.0
    %1608 = vmatpush1.msra.mxu0 0.0
    %1609 = vmatprep.mubr.f32.mxu0 0.0
    %1610 = vmatmul.mubr.f32.gmra.mrb[0].mxu0 %v1543
    %v1611 = vpop.f32.mrb[0].mxu0
    %v1612 = vadd.f32 0.0, %v1611
    %v1613 = vpop.f32.mrb[0].mxu0
    %1614 = vdwg.mxu0
    %vm1615 = vcmask 123904
    %1616 = vst.msk [vmem:[#allocation3] sm:$0x3] %vm1615, %v1612
    // Predicated region
    $region81: #{hf_text_encoder_forward.1} parent=1 // pred_check
      _
    $region82: #{hf_text_encoder_forward.1} parent=1 // pred_check_branch
      %1618 = sbr.rel (0) target = $region84
    $region83: #{hf_text_encoder_forward.1} parent=1 // pred_region
      %s1620 = ssub.s32 32, 32
      %1621 = vsyncadd [#allocation4], %s1620
      %s1623 = sshll.u32 [#allocation3], 4
      %s1624 = int_to_ptr.vmem [resolvable:$true] %s1623
      %1626 = dma.vmem_to_hbm [thread:$0]  %s1624, 32, %s18, [#allocation4]
    $region84: #{hf_text_encoder_forward.1} parent=1 // pred_fallthru
      _
    // Predicated region
    $region85: #{hf_text_encoder_forward.1} parent=1 // pred_check
      _
    $region86: #{hf_text_encoder_forward.1} parent=1 // pred_check_branch
      %1628 = sbr.rel (0) target = $region88
    $region87: #{hf_text_encoder_forward.1} parent=1 // pred_region
      %1629 = dma.done [#allocation4], 32
    $region88: #{hf_text_encoder_forward.1} parent=1 // pred_fallthru
      _
    %1630 = vsyncpa [#allocation4], 1

</llo_original>
